<compile_context>
chip_gen: v7x
topology: tpu7x:2x2x1
jax: 0.10.0
libtpu: 0.0.40
codegen_flags: <defaults>
</compile_context>

<pallas_src>
import functools

import jax
import jax.numpy as jnp
from jax import lax
from jax.experimental import pallas as pl
from jax.experimental.pallas import tpu as pltpu

IN_F = 3            # input features (torch spec)
H1 = 100            # first hidden width (torch spec)
H2 = 1000           # second hidden width (torch spec)
H1_PAD = 128        # padded to one full lane register
H2_PAD = 1024       # padded to a multiple of 128 lanes
H2_CHUNK = 256      # inner-loop chunk of H2 (keeps the live set to (TB, 256))
N_CHUNKS = H2_PAD // H2_CHUNK


def _round_up(x, m):
    return (x + m - 1) // m * m


def _mlp_kernel(x_ref, w1_ref, b1_ref, w2_ref, b2_ref, w3_ref, b3_ref, o_ref):
    tb = x_ref.shape[0]
    out_pad = o_ref.shape[1]
    n_chunks = w2_ref.shape[0]

    x = x_ref[...]                      # (TB, 3)      f32
    w1 = w1_ref[...]                    # (3, H1_PAD)  f32

    # Layer 1 (Linear(3,100) + ReLU) on the VPU: three broadcast FMAs.
    h1 = (x[:, 0:1] * w1[0:1, :]
          + x[:, 1:2] * w1[1:2, :]
          + x[:, 2:3] * w1[2:3, :]
          + b1_ref[...])
    h1 = jnp.maximum(h1, 0.0)           # (TB, H1_PAD) f32
    h1_bf16 = h1.astype(jnp.bfloat16)   # cast once, reused by every chunk

    # Layers 2+3 fused, chunked over H2 so the full (TB, H2_PAD) f32 h2 is never
    # materialized.  Each iteration: h2_c = relu(h1 @ w2[:, c] + b2[:, c]) and
    # acc += h2_c @ w3[c, :], all with bf16 MXU inputs and f32 accumulation.
    def body(c, acc):
        w2_c = w2_ref[c]                # (H1_PAD, CHUNK)   bf16
        b2_c = b2_ref[c]                # (1, CHUNK)        f32
        w3_c = w3_ref[c]                # (CHUNK, OUT_PAD)  bf16
        h2_c = jnp.dot(h1_bf16, w2_c, preferred_element_type=jnp.float32) + b2_c
        h2_c = jnp.maximum(h2_c, 0.0)
        return acc + jnp.dot(h2_c.astype(jnp.bfloat16), w3_c,
                             preferred_element_type=jnp.float32)

    acc0 = jnp.zeros((tb, out_pad), jnp.float32)
    acc = lax.fori_loop(0, n_chunks, body, acc0, unroll=True)

    # Layer 3 bias; lane-dense padded output, full unmasked stores.
    o_ref[...] = acc + b3_ref[...]


def init_params(key, state_dims):
    """Raw params mirroring torch.nn.Linear default init, stored as (fan_in, fan_out)."""
    def linear(key, fan_in, fan_out):
        kw, kb = jax.random.split(key)
        bound = 1.0 / jnp.sqrt(fan_in)
        w = jax.random.uniform(kw, (fan_in, fan_out), jnp.float32, -bound, bound)
        b = jax.random.uniform(kb, (1, fan_out), jnp.float32, -bound, bound)
        return w, b

    k1, k2, k3 = jax.random.split(key, 3)
    w1, b1 = linear(k1, IN_F, H1)
    w2, b2 = linear(k2, H1, H2)
    w3, b3 = linear(k3, H2, state_dims)
    return {"w1": w1, "b1": b1, "w2": w2, "b2": b2, "w3": w3, "b3": b3}


def prepare_params(params, state_dims):
    """Host prep: zero-pad to lane multiples, cast big weights to bf16, pre-chunk H2."""
    out_pad = _round_up(state_dims, 128)      # supports any state_dims, lane-dense output

    w1 = jnp.pad(params["w1"], ((0, 0), (0, H1_PAD - H1))).astype(jnp.float32)
    b1 = jnp.pad(params["b1"], ((0, 0), (0, H1_PAD - H1))).astype(jnp.float32)

    w2 = jnp.pad(params["w2"], ((0, H1_PAD - H1), (0, H2_PAD - H2))).astype(jnp.bfloat16)
    b2 = jnp.pad(params["b2"], ((0, 0), (0, H2_PAD - H2))).astype(jnp.float32)
    w3 = jnp.pad(params["w3"],
                 ((0, H2_PAD - H2), (0, out_pad - state_dims))).astype(jnp.bfloat16)
    b3 = jnp.pad(params["b3"], ((0, 0), (0, out_pad - state_dims))).astype(jnp.float32)

    # Pre-chunk along H2 so the kernel indexes a leading chunk axis (no dynamic
    # lane-dim slicing needed): w2c[c] == w2[:, c*CHUNK:(c+1)*CHUNK], etc.
    w2c = w2.reshape(H1_PAD, N_CHUNKS, H2_CHUNK).swapaxes(0, 1)   # (NC, H1_PAD, CHUNK)
    b2c = b2.reshape(N_CHUNKS, 1, H2_CHUNK)                        # (NC, 1, CHUNK)
    w3c = w3.reshape(N_CHUNKS, H2_CHUNK, out_pad)                  # (NC, CHUNK, OUT_PAD)

    return {"w1": w1, "b1": b1, "w2": w2c, "b2": b2c, "w3": w3c, "b3": b3}


@functools.partial(jax.jit, static_argnames=("state_dims", "block_tb"))
def feed_forward_net(states, prepared, state_dims, *, block_tb=512):
    """states: (B, 3) float32. prepared: output of prepare_params. Returns (B, state_dims)."""
    w1, b1 = prepared["w1"], prepared["b1"]
    w2, b2 = prepared["w2"], prepared["b2"]
    w3, b3 = prepared["w3"], prepared["b3"]
    out_pad = b3.shape[1]

    B = states.shape[0]
    B8 = _round_up(B, 8)
    TB = min(_round_up(block_tb, 8), B8)
    # v7x megacore: if the whole batch fits in one tile but is splittable, use two
    # equal tiles so both TensorCores get work (harmless on 1-TC v5e/v6e).
    if TB == B8 and B8 >= 16:
        TB = _round_up(B8 // 2, 8)
    Bp = _round_up(B, TB)
    if Bp != B:
        states = jnp.pad(states, ((0, Bp - B), (0, 0)))
    grid = (Bp // TB,)

    def resident(arr):
        # Whole array, same block every grid step -> DMA'd once, stays in VMEM.
        nd = arr.ndim
        return pl.BlockSpec(arr.shape, lambda i, _nd=nd: (0,) * _nd)

    out = pl.pallas_call(
        _mlp_kernel,
        out_shape=jax.ShapeDtypeStruct((Bp, out_pad), jnp.float32),
        grid=grid,
        in_specs=[
            pl.BlockSpec((TB, IN_F), lambda i: (i, 0)),   # activation tile (pipelined)
            resident(w1), resident(b1),
            resident(w2), resident(b2),
            resident(w3), resident(b3),
        ],
        out_specs=pl.BlockSpec((TB, out_pad), lambda i: (i, 0)),
        compiler_params=pltpu.CompilerParams(
            dimension_semantics=("parallel",),            # megacore sharding on v7x
        ),
    )(states, w1, b1, w2, b2, w3, b3)

    return out[:B, :state_dims]


if __name__ == "__main__":
    key = jax.random.PRNGKey(0)
    k_params, k_x = jax.random.split(key)

    state_dims = 4
    batch = 200   # not a multiple of 8 -> exercises padding; splits to a grid of 2 tiles

    raw = init_params(k_params, state_dims)
    prepared = prepare_params(raw, state_dims)
    states = jax.random.normal(k_x, (batch, IN_F), jnp.float32)

    out = feed_forward_net(states, prepared, state_dims)
    out = jax.block_until_ready(out)
    assert out.shape == (batch, state_dims)

    # Pure-JAX reference mirroring the kernel's numerics exactly:
    # f32 broadcast-FMA layer 1, bf16-input / f32-accumulate MXU layers 2 and 3.
    w1, b1 = raw["w1"], raw["b1"]
    h1 = jnp.maximum(states[:, 0:1] * w1[0:1, :]
                     + states[:, 1:2] * w1[1:2, :]
                     + states[:, 2:3] * w1[2:3, :]
                     + b1, 0.0)
    h2 = jnp.maximum(
        jnp.dot(h1.astype(jnp.bfloat16), raw["w2"].astype(jnp.bfloat16),
                preferred_element_type=jnp.float32) + raw["b2"], 0.0)
    ref = jnp.dot(h2.astype(jnp.bfloat16), raw["w3"].astype(jnp.bfloat16),
                  preferred_element_type=jnp.float32) + raw["b3"]

    max_err = float(jnp.max(jnp.abs(out - ref)))
    assert jnp.allclose(out, ref, atol=5e-3, rtol=5e-3), max_err

    print("KERNEL_OK")
</pallas_src>

<mosaic_0001>
module attributes {stable_mosaic.version = 11 : i64} {
  func.func @_mlp_kernel(%arg0: i32, %arg1: memref<104x3xf32, #tpu.memory_space<vmem>>, %arg2: memref<3x128xf32, #tpu.memory_space<vmem>>, %arg3: memref<1x128xf32, #tpu.memory_space<vmem>>, %arg4: memref<4x128x256xbf16, #tpu.memory_space<vmem>>, %arg5: memref<4x1x256xf32, #tpu.memory_space<vmem>>, %arg6: memref<4x256x128xbf16, #tpu.memory_space<vmem>>, %arg7: memref<1x128xf32, #tpu.memory_space<vmem>>, %arg8: memref<104x128xf32, #tpu.memory_space<vmem>>) attributes {dimension_semantics = [#tpu.dimension_semantics<parallel>], iteration_bounds = array<i64: 2>, scalar_prefetch = 0 : i64, scratch_operands = 0 : i64, tpu.core_type = #tpu.core_type<tc>, window_params = [{transform_indices = @transform_0, window_bounds = array<i64: 104, 3>}, {pipeline_mode = #tpu.pipeline_mode<synchronous>, transform_indices = @transform_1, window_bounds = array<i64: 3, 128>}, {pipeline_mode = #tpu.pipeline_mode<synchronous>, transform_indices = @transform_2, window_bounds = array<i64: 1, 128>}, {pipeline_mode = #tpu.pipeline_mode<synchronous>, transform_indices = @transform_3, window_bounds = array<i64: 4, 128, 256>}, {pipeline_mode = #tpu.pipeline_mode<synchronous>, transform_indices = @transform_4, window_bounds = array<i64: 4, 1, 256>}, {pipeline_mode = #tpu.pipeline_mode<synchronous>, transform_indices = @transform_5, window_bounds = array<i64: 4, 256, 128>}, {pipeline_mode = #tpu.pipeline_mode<synchronous>, transform_indices = @transform_6, window_bounds = array<i64: 1, 128>}, {transform_indices = @transform_7, window_bounds = array<i64: 104, 128>}]} {
    %c0 = arith.constant 0 : index
    %c0_0 = arith.constant 0 : index
    %0 = vector.load %arg1[%c0, %c0_0] : memref<104x3xf32, #tpu.memory_space<vmem>>, vector<104x3xf32>
    %c0_1 = arith.constant 0 : index
    %c0_2 = arith.constant 0 : index
    %1 = vector.load %arg2[%c0_1, %c0_2] : memref<3x128xf32, #tpu.memory_space<vmem>>, vector<3x128xf32>
    %2 = vector.extract_strided_slice %0 {offsets = [0, 0], sizes = [104, 1], strides = [1, 1]} : vector<104x3xf32> to vector<104x1xf32>
    %3 = vector.extract_strided_slice %1 {offsets = [0, 0], sizes = [1, 128], strides = [1, 1]} : vector<3x128xf32> to vector<1x128xf32>
    %4 = vector.broadcast %2 : vector<104x1xf32> to vector<104x128xf32>
    %5 = vector.broadcast %3 : vector<1x128xf32> to vector<104x128xf32>
    %6 = arith.mulf %4, %5 : vector<104x128xf32>
    %7 = vector.extract_strided_slice %0 {offsets = [0, 1], sizes = [104, 1], strides = [1, 1]} : vector<104x3xf32> to vector<104x1xf32>
    %8 = vector.extract_strided_slice %1 {offsets = [1, 0], sizes = [1, 128], strides = [1, 1]} : vector<3x128xf32> to vector<1x128xf32>
    %9 = vector.broadcast %7 : vector<104x1xf32> to vector<104x128xf32>
    %10 = vector.broadcast %8 : vector<1x128xf32> to vector<104x128xf32>
    %11 = arith.mulf %9, %10 : vector<104x128xf32>
    %12 = arith.addf %6, %11 : vector<104x128xf32>
    %13 = vector.extract_strided_slice %0 {offsets = [0, 2], sizes = [104, 1], strides = [1, 1]} : vector<104x3xf32> to vector<104x1xf32>
    %14 = vector.extract_strided_slice %1 {offsets = [2, 0], sizes = [1, 128], strides = [1, 1]} : vector<3x128xf32> to vector<1x128xf32>
    %15 = vector.broadcast %13 : vector<104x1xf32> to vector<104x128xf32>
    %16 = vector.broadcast %14 : vector<1x128xf32> to vector<104x128xf32>
    %17 = arith.mulf %15, %16 : vector<104x128xf32>
    %18 = arith.addf %12, %17 : vector<104x128xf32>
    %c0_3 = arith.constant 0 : index
    %c0_4 = arith.constant 0 : index
    %19 = vector.load %arg3[%c0_3, %c0_4] : memref<1x128xf32, #tpu.memory_space<vmem>>, vector<1x128xf32>
    %20 = vector.broadcast %19 : vector<1x128xf32> to vector<104x128xf32>
    %21 = arith.addf %18, %20 : vector<104x128xf32>
    %cst = arith.constant 0.000000e+00 : f32
    %22 = vector.broadcast %cst : f32 to vector<104x128xf32>
    %23 = arith.maximumf %21, %22 : vector<104x128xf32>
    %24 = arith.truncf %23 : vector<104x128xf32> to vector<104x128xbf16>
    %cst_5 = arith.constant 0.000000e+00 : f32
    %25 = vector.broadcast %cst_5 : f32 to vector<104x128xf32>
    %c0_i32 = arith.constant 0 : i32
    %26 = arith.index_cast %c0_i32 : i32 to index
    %c0_6 = arith.constant 0 : index
    %c0_7 = arith.constant 0 : index
    %27 = vector.load %arg4[%26, %c0_6, %c0_7] : memref<4x128x256xbf16, #tpu.memory_space<vmem>>, vector<1x128x256xbf16>
    %28 = vector.shape_cast %27 : vector<1x128x256xbf16> to vector<128x256xbf16>
    %29 = arith.index_cast %c0_i32 : i32 to index
    %c0_8 = arith.constant 0 : index
    %c0_9 = arith.constant 0 : index
    %30 = vector.load %arg5[%29, %c0_8, %c0_9] : memref<4x1x256xf32, #tpu.memory_space<vmem>>, vector<1x1x256xf32>
    %31 = vector.shape_cast %30 : vector<1x1x256xf32> to vector<1x256xf32>
    %32 = arith.index_cast %c0_i32 : i32 to index
    %c0_10 = arith.constant 0 : index
    %c0_11 = arith.constant 0 : index
    %33 = vector.load %arg6[%32, %c0_10, %c0_11] : memref<4x256x128xbf16, #tpu.memory_space<vmem>>, vector<1x256x128xbf16>
    %34 = vector.shape_cast %33 : vector<1x256x128xbf16> to vector<256x128xbf16>
    %cst_12 = arith.constant dense<0.000000e+00> : vector<104x256xf32>
    %35 = tpu.matmul %24, %28, %cst_12 {dimension_numbers = #tpu.dot_dimension_numbers<[1], [0], [0], [1], [0, 0, 1, 1], [], []>} : vector<104x128xbf16>, vector<128x256xbf16>, vector<104x256xf32> -> vector<104x256xf32>
    %36 = vector.broadcast %31 : vector<1x256xf32> to vector<104x256xf32>
    %37 = arith.addf %35, %36 : vector<104x256xf32>
    %cst_13 = arith.constant 0.000000e+00 : f32
    %38 = vector.broadcast %cst_13 : f32 to vector<104x256xf32>
    %39 = arith.maximumf %37, %38 : vector<104x256xf32>
    %40 = arith.truncf %39 : vector<104x256xf32> to vector<104x256xbf16>
    %cst_14 = arith.constant dense<0.000000e+00> : vector<104x128xf32>
    %41 = tpu.matmul %40, %34, %cst_14 {dimension_numbers = #tpu.dot_dimension_numbers<[1], [0], [0], [1], [0, 0, 1, 1], [], []>} : vector<104x256xbf16>, vector<256x128xbf16>, vector<104x128xf32> -> vector<104x128xf32>
    %42 = arith.addf %25, %41 : vector<104x128xf32>
    %c1_i32 = arith.constant 1 : i32
    %43 = arith.index_cast %c1_i32 : i32 to index
    %c0_15 = arith.constant 0 : index
    %c0_16 = arith.constant 0 : index
    %44 = vector.load %arg4[%43, %c0_15, %c0_16] : memref<4x128x256xbf16, #tpu.memory_space<vmem>>, vector<1x128x256xbf16>
    %45 = vector.shape_cast %44 : vector<1x128x256xbf16> to vector<128x256xbf16>
    %46 = arith.index_cast %c1_i32 : i32 to index
    %c0_17 = arith.constant 0 : index
    %c0_18 = arith.constant 0 : index
    %47 = vector.load %arg5[%46, %c0_17, %c0_18] : memref<4x1x256xf32, #tpu.memory_space<vmem>>, vector<1x1x256xf32>
    %48 = vector.shape_cast %47 : vector<1x1x256xf32> to vector<1x256xf32>
    %49 = arith.index_cast %c1_i32 : i32 to index
    %c0_19 = arith.constant 0 : index
    %c0_20 = arith.constant 0 : index
    %50 = vector.load %arg6[%49, %c0_19, %c0_20] : memref<4x256x128xbf16, #tpu.memory_space<vmem>>, vector<1x256x128xbf16>
    %51 = vector.shape_cast %50 : vector<1x256x128xbf16> to vector<256x128xbf16>
    %cst_21 = arith.constant dense<0.000000e+00> : vector<104x256xf32>
    %52 = tpu.matmul %24, %45, %cst_21 {dimension_numbers = #tpu.dot_dimension_numbers<[1], [0], [0], [1], [0, 0, 1, 1], [], []>} : vector<104x128xbf16>, vector<128x256xbf16>, vector<104x256xf32> -> vector<104x256xf32>
    %53 = vector.broadcast %48 : vector<1x256xf32> to vector<104x256xf32>
    %54 = arith.addf %52, %53 : vector<104x256xf32>
    %cst_22 = arith.constant 0.000000e+00 : f32
    %55 = vector.broadcast %cst_22 : f32 to vector<104x256xf32>
    %56 = arith.maximumf %54, %55 : vector<104x256xf32>
    %57 = arith.truncf %56 : vector<104x256xf32> to vector<104x256xbf16>
    %cst_23 = arith.constant dense<0.000000e+00> : vector<104x128xf32>
    %58 = tpu.matmul %57, %51, %cst_23 {dimension_numbers = #tpu.dot_dimension_numbers<[1], [0], [0], [1], [0, 0, 1, 1], [], []>} : vector<104x256xbf16>, vector<256x128xbf16>, vector<104x128xf32> -> vector<104x128xf32>
    %59 = arith.addf %42, %58 : vector<104x128xf32>
    %c2_i32 = arith.constant 2 : i32
    %60 = arith.index_cast %c2_i32 : i32 to index
    %c0_24 = arith.constant 0 : index
    %c0_25 = arith.constant 0 : index
    %61 = vector.load %arg4[%60, %c0_24, %c0_25] : memref<4x128x256xbf16, #tpu.memory_space<vmem>>, vector<1x128x256xbf16>
    %62 = vector.shape_cast %61 : vector<1x128x256xbf16> to vector<128x256xbf16>
    %63 = arith.index_cast %c2_i32 : i32 to index
    %c0_26 = arith.constant 0 : index
    %c0_27 = arith.constant 0 : index
    %64 = vector.load %arg5[%63, %c0_26, %c0_27] : memref<4x1x256xf32, #tpu.memory_space<vmem>>, vector<1x1x256xf32>
    %65 = vector.shape_cast %64 : vector<1x1x256xf32> to vector<1x256xf32>
    %66 = arith.index_cast %c2_i32 : i32 to index
    %c0_28 = arith.constant 0 : index
    %c0_29 = arith.constant 0 : index
    %67 = vector.load %arg6[%66, %c0_28, %c0_29] : memref<4x256x128xbf16, #tpu.memory_space<vmem>>, vector<1x256x128xbf16>
    %68 = vector.shape_cast %67 : vector<1x256x128xbf16> to vector<256x128xbf16>
    %cst_30 = arith.constant dense<0.000000e+00> : vector<104x256xf32>
    %69 = tpu.matmul %24, %62, %cst_30 {dimension_numbers = #tpu.dot_dimension_numbers<[1], [0], [0], [1], [0, 0, 1, 1], [], []>} : vector<104x128xbf16>, vector<128x256xbf16>, vector<104x256xf32> -> vector<104x256xf32>
    %70 = vector.broadcast %65 : vector<1x256xf32> to vector<104x256xf32>
    %71 = arith.addf %69, %70 : vector<104x256xf32>
    %cst_31 = arith.constant 0.000000e+00 : f32
    %72 = vector.broadcast %cst_31 : f32 to vector<104x256xf32>
    %73 = arith.maximumf %71, %72 : vector<104x256xf32>
    %74 = arith.truncf %73 : vector<104x256xf32> to vector<104x256xbf16>
    %cst_32 = arith.constant dense<0.000000e+00> : vector<104x128xf32>
    %75 = tpu.matmul %74, %68, %cst_32 {dimension_numbers = #tpu.dot_dimension_numbers<[1], [0], [0], [1], [0, 0, 1, 1], [], []>} : vector<104x256xbf16>, vector<256x128xbf16>, vector<104x128xf32> -> vector<104x128xf32>
    %76 = arith.addf %59, %75 : vector<104x128xf32>
    %c3_i32 = arith.constant 3 : i32
    %77 = arith.index_cast %c3_i32 : i32 to index
    %c0_33 = arith.constant 0 : index
    %c0_34 = arith.constant 0 : index
    %78 = vector.load %arg4[%77, %c0_33, %c0_34] : memref<4x128x256xbf16, #tpu.memory_space<vmem>>, vector<1x128x256xbf16>
    %79 = vector.shape_cast %78 : vector<1x128x256xbf16> to vector<128x256xbf16>
    %80 = arith.index_cast %c3_i32 : i32 to index
    %c0_35 = arith.constant 0 : index
    %c0_36 = arith.constant 0 : index
    %81 = vector.load %arg5[%80, %c0_35, %c0_36] : memref<4x1x256xf32, #tpu.memory_space<vmem>>, vector<1x1x256xf32>
    %82 = vector.shape_cast %81 : vector<1x1x256xf32> to vector<1x256xf32>
    %83 = arith.index_cast %c3_i32 : i32 to index
    %c0_37 = arith.constant 0 : index
    %c0_38 = arith.constant 0 : index
    %84 = vector.load %arg6[%83, %c0_37, %c0_38] : memref<4x256x128xbf16, #tpu.memory_space<vmem>>, vector<1x256x128xbf16>
    %85 = vector.shape_cast %84 : vector<1x256x128xbf16> to vector<256x128xbf16>
    %cst_39 = arith.constant dense<0.000000e+00> : vector<104x256xf32>
    %86 = tpu.matmul %24, %79, %cst_39 {dimension_numbers = #tpu.dot_dimension_numbers<[1], [0], [0], [1], [0, 0, 1, 1], [], []>} : vector<104x128xbf16>, vector<128x256xbf16>, vector<104x256xf32> -> vector<104x256xf32>
    %87 = vector.broadcast %82 : vector<1x256xf32> to vector<104x256xf32>
    %88 = arith.addf %86, %87 : vector<104x256xf32>
    %cst_40 = arith.constant 0.000000e+00 : f32
    %89 = vector.broadcast %cst_40 : f32 to vector<104x256xf32>
    %90 = arith.maximumf %88, %89 : vector<104x256xf32>
    %91 = arith.truncf %90 : vector<104x256xf32> to vector<104x256xbf16>
    %cst_41 = arith.constant dense<0.000000e+00> : vector<104x128xf32>
    %92 = tpu.matmul %91, %85, %cst_41 {dimension_numbers = #tpu.dot_dimension_numbers<[1], [0], [0], [1], [0, 0, 1, 1], [], []>} : vector<104x256xbf16>, vector<256x128xbf16>, vector<104x128xf32> -> vector<104x128xf32>
    %93 = arith.addf %76, %92 : vector<104x128xf32>
    %c4_i32 = arith.constant 4 : i32
    %c0_42 = arith.constant 0 : index
    %c0_43 = arith.constant 0 : index
    %94 = vector.load %arg7[%c0_42, %c0_43] : memref<1x128xf32, #tpu.memory_space<vmem>>, vector<1x128xf32>
    %95 = vector.broadcast %94 : vector<1x128xf32> to vector<104x128xf32>
    %96 = arith.addf %93, %95 : vector<104x128xf32>
    %c0_44 = arith.constant 0 : index
    %c0_45 = arith.constant 0 : index
    %97 = vector.load %arg8[%c0_44, %c0_45] : memref<104x128xf32, #tpu.memory_space<vmem>>, vector<104x128xf32>
    tpu.vector_store %arg8[%c0_44, %c0_45], %96 {strides = array<i32>} : memref<104x128xf32, #tpu.memory_space<vmem>>, vector<104x128xf32>,
    return
  }
  func.func @transform_0(%arg0: i32) -> (i32, i32) {
    %c0_i32 = arith.constant 0 : i32
    %c0_i32_0 = arith.constant 0 : i32
    return %arg0, %c0_i32 : i32, i32
  }
  func.func @transform_1(%arg0: i32) -> (i32, i32) {
    %c0_i32 = arith.constant 0 : i32
    %c0_i32_0 = arith.constant 0 : i32
    %c0_i32_1 = arith.constant 0 : i32
    return %c0_i32, %c0_i32_0 : i32, i32
  }
  func.func @transform_2(%arg0: i32) -> (i32, i32) {
    %c0_i32 = arith.constant 0 : i32
    %c0_i32_0 = arith.constant 0 : i32
    %c0_i32_1 = arith.constant 0 : i32
    return %c0_i32, %c0_i32_0 : i32, i32
  }
  func.func @transform_3(%arg0: i32) -> (i32, i32, i32) {
    %c0_i32 = arith.constant 0 : i32
    %c0_i32_0 = arith.constant 0 : i32
    %c0_i32_1 = arith.constant 0 : i32
    %c0_i32_2 = arith.constant 0 : i32
    return %c0_i32, %c0_i32_0, %c0_i32_1 : i32, i32, i32
  }
  func.func @transform_4(%arg0: i32) -> (i32, i32, i32) {
    %c0_i32 = arith.constant 0 : i32
    %c0_i32_0 = arith.constant 0 : i32
    %c0_i32_1 = arith.constant 0 : i32
    %c0_i32_2 = arith.constant 0 : i32
    return %c0_i32, %c0_i32_0, %c0_i32_1 : i32, i32, i32
  }
  func.func @transform_5(%arg0: i32) -> (i32, i32, i32) {
    %c0_i32 = arith.constant 0 : i32
    %c0_i32_0 = arith.constant 0 : i32
    %c0_i32_1 = arith.constant 0 : i32
    %c0_i32_2 = arith.constant 0 : i32
    return %c0_i32, %c0_i32_0, %c0_i32_1 : i32, i32, i32
  }
  func.func @transform_6(%arg0: i32) -> (i32, i32) {
    %c0_i32 = arith.constant 0 : i32
    %c0_i32_0 = arith.constant 0 : i32
    %c0_i32_1 = arith.constant 0 : i32
    return %c0_i32, %c0_i32_0 : i32, i32
  }
  func.func @transform_7(%arg0: i32) -> (i32, i32) {
    %c0_i32 = arith.constant 0 : i32
    %c0_i32_0 = arith.constant 0 : i32
    return %arg0, %c0_i32 : i32, i32
  }
}

</mosaic_0001>

<llo_original>
// kernel: feed_forward_net.1
$region0: #{feed_forward_net.1}
  #allocation0 [shape = 'u32[]', space=smem, size = 0x4, offset = 0x4, fixed_abs, tag = 'smem constant byte address 0x4 - core index']
  #allocation1 [shape = 'u32[144,128]{1,0:T(1,128)}', space=vmem, size = 0x12000, scoped, tag = 'internal scratch']
  %s0 = inlined_call_operand.vmem [shape: f32[208,3], index: 0, kind: input, shape index: {}]
  %s1 = inlined_call_operand.vmem [shape: f32[3,128], index: 1, kind: input, shape index: {}]
  %s2 = inlined_call_operand.vmem [shape: f32[1,128], index: 2, kind: input, shape index: {}]
  %s3 = inlined_call_operand.vmem [shape: bf16[4,128,256], index: 3, kind: input, shape index: {}]
  %s4 = inlined_call_operand.vmem [shape: f32[4,1,256], index: 4, kind: input, shape index: {}]
  %s5 = inlined_call_operand.hbm [shape: bf16[4,256,128], index: 5, kind: input, shape index: {}]
  %s6 = inlined_call_operand.vmem [shape: f32[1,128], index: 6, kind: input, shape index: {}]
  %s7 = inlined_call_operand.vmem [shape: f32[208,128], index: 7, kind: output, shape index: {}]
  %s8 = sld [smem:[#allocation0]]
  $region65: #{feed_forward_net.1} parent=0
    _
  %s10 = ssub.s32 1, %s8
  %s11 = scalar_select 0, %s10, %s8
  $region1: #{feed_forward_net.1} parent=0
    #allocation2 [shape = 'u8[262144]{0}', space=vmem, size = 0x40000, scoped, tag = 'input window, operand 5, single buffered']
    #allocation3 [shape = 's32[2]{0}', space=sflag, size = 0x8, scoped, tag = 'scoped memory for feed_forward_net.1']
    %12 = vsyncpa [#allocation3], 0
    loop: start=0, step=1, limit=4
    $region2: #{feed_forward_net.1} parent=1 // loop_pre_header
      _
    $region3: #{feed_forward_net.1} parent=1 // loop_header
      %s14 = sphi 0, %s18
      %p15 = scmp.ge.s32.totalorder %s14, 4
      %s24 = sphi 0, %s26
      %s27 = sphi 0, %s24
      %s28 = sphi 0, %s27
      %s44 = sphi 0, %s28
      %s48 = sphi 0, %s48
      %s50 = sphi 0, %s48
      %s51 = sphi 0, %s50
      %s65 = sphi 0, %s51
      %s69 = sphi 0, %s69
      %s71 = sphi 0, %s69
      %s72 = sphi 0, %s71
      %s86 = sphi 0, %s72
      %s90 = sphi 0, %s90
      %s92 = sphi 0, %s90
      %s93 = sphi 0, %s92
      %s107 = sphi 0, %s93
      %s111 = sphi 0, %s111
      %s113 = sphi 0, %s111
      %s114 = sphi 0, %s113
      %s128 = sphi 0, %s114
      %s132 = sphi 0, %s132
      %s134 = sphi 0, %s132
      %s135 = sphi 0, %s134
      %s149 = sphi 0, %s135
      %s153 = sphi 0, %s153
      %s155 = sphi 0, %s153
      %s156 = sphi 0, %s155
      %s170 = sphi 0, %s156
      %s176 = sphi 0, %s178
      %s179 = sphi 0, %s176
      %s180 = sphi 0, %s179
      %s196 = sphi 0, %s180
    $region4: #{feed_forward_net.1} parent=1 // loop_header_branch
      %17 = sbr.rel (%p15) target = $region8
    $region5: #{feed_forward_net.1} parent=1 // loop_body
      %s19 = ssub.s32 %s14, 1
      %s20 = ssub.s32 %s14, 2
      %s21 = sadd.s32 %s14, 1
      %s22 = ssub.s32 %s14, %s21
      %p23 = scmp.eq.s32.totalorder %s22, 0
      %s25 = sadd.s32 %s24, 1
      %s26 = scalar_select %p23, %s24, %s25
      %p29 = pneg %p23
      %p30 = scmp.eq.s32.totalorder %s14, 1
      %p31 = por %p29, %p30
      %p32 = scmp.ne.s32.totalorder %s24, %s27
      %p33 = scmp.eq.s32.totalorder %s14, 0
      %p34 = por %p32, %p33
      %p35 = scmp.ne.s32.totalorder %s24, %s27
      %p36 = scmp.eq.s32.totalorder %s19, 1
      %p37 = por %p35, %p36
      %p38 = scmp.ne.s32.totalorder %s27, %s28
      %p39 = scmp.eq.s32.totalorder %s19, 0
      %p40 = por %p38, %p39
      %p41 = scmp.ne.s32.totalorder %s27, %s28
      %p42 = scmp.eq.s32.totalorder %s20, 1
      %p43 = por %p41, %p42
      %p45 = scmp.ne.s32.totalorder %s28, %s44
      %p46 = scmp.eq.s32.totalorder %s20, 0
      %p47 = por %p45, %p46
      %s49 = sadd.s32 %s48, 1
      %p52 = scmp.eq.s32.totalorder %s14, 1
      %p53 = scmp.ne.s32.totalorder %s48, %s50
      %p54 = scmp.eq.s32.totalorder %s14, 0
      %p55 = por %p53, %p54
      %p56 = scmp.ne.s32.totalorder %s48, %s50
      %p57 = scmp.eq.s32.totalorder %s19, 1
      %p58 = por %p56, %p57
      %p59 = scmp.ne.s32.totalorder %s50, %s51
      %p60 = scmp.eq.s32.totalorder %s19, 0
      %p61 = por %p59, %p60
      %p62 = scmp.ne.s32.totalorder %s50, %s51
      %p63 = scmp.eq.s32.totalorder %s20, 1
      %p64 = por %p62, %p63
      %p66 = scmp.ne.s32.totalorder %s51, %s65
      %p67 = scmp.eq.s32.totalorder %s20, 0
      %p68 = por %p66, %p67
      %s70 = sadd.s32 %s69, 1
      %p73 = scmp.eq.s32.totalorder %s14, 1
      %p74 = scmp.ne.s32.totalorder %s69, %s71
      %p75 = scmp.eq.s32.totalorder %s14, 0
      %p76 = por %p74, %p75
      %p77 = scmp.ne.s32.totalorder %s69, %s71
      %p78 = scmp.eq.s32.totalorder %s19, 1
      %p79 = por %p77, %p78
      %p80 = scmp.ne.s32.totalorder %s71, %s72
      %p81 = scmp.eq.s32.totalorder %s19, 0
      %p82 = por %p80, %p81
      %p83 = scmp.ne.s32.totalorder %s71, %s72
      %p84 = scmp.eq.s32.totalorder %s20, 1
      %p85 = por %p83, %p84
      %p87 = scmp.ne.s32.totalorder %s72, %s86
      %p88 = scmp.eq.s32.totalorder %s20, 0
      %p89 = por %p87, %p88
      %s91 = sadd.s32 %s90, 1
      %p94 = scmp.eq.s32.totalorder %s14, 1
      %p95 = scmp.ne.s32.totalorder %s90, %s92
      %p96 = scmp.eq.s32.totalorder %s14, 0
      %p97 = por %p95, %p96
      %p98 = scmp.ne.s32.totalorder %s90, %s92
      %p99 = scmp.eq.s32.totalorder %s19, 1
      %p100 = por %p98, %p99
      %p101 = scmp.ne.s32.totalorder %s92, %s93
      %p102 = scmp.eq.s32.totalorder %s19, 0
      %p103 = por %p101, %p102
      %p104 = scmp.ne.s32.totalorder %s92, %s93
      %p105 = scmp.eq.s32.totalorder %s20, 1
      %p106 = por %p104, %p105
      %p108 = scmp.ne.s32.totalorder %s93, %s107
      %p109 = scmp.eq.s32.totalorder %s20, 0
      %p110 = por %p108, %p109
      %s112 = sadd.s32 %s111, 1
      %p115 = scmp.eq.s32.totalorder %s14, 1
      %p116 = scmp.ne.s32.totalorder %s111, %s113
      %p117 = scmp.eq.s32.totalorder %s14, 0
      %p118 = por %p116, %p117
      %p119 = scmp.ne.s32.totalorder %s111, %s113
      %p120 = scmp.eq.s32.totalorder %s19, 1
      %p121 = por %p119, %p120
      %p122 = scmp.ne.s32.totalorder %s113, %s114
      %p123 = scmp.eq.s32.totalorder %s19, 0
      %p124 = por %p122, %p123
      %p125 = scmp.ne.s32.totalorder %s113, %s114
      %p126 = scmp.eq.s32.totalorder %s20, 1
      %p127 = por %p125, %p126
      %p129 = scmp.ne.s32.totalorder %s114, %s128
      %p130 = scmp.eq.s32.totalorder %s20, 0
      %p131 = por %p129, %p130
      %s133 = sadd.s32 %s132, 1
      %p136 = scmp.eq.s32.totalorder %s14, 1
      %p137 = scmp.ne.s32.totalorder %s132, %s134
      %p138 = scmp.eq.s32.totalorder %s14, 0
      %p139 = por %p137, %p138
      %p140 = scmp.ne.s32.totalorder %s132, %s134
      %p141 = scmp.eq.s32.totalorder %s19, 1
      %p142 = por %p140, %p141
      %p143 = scmp.ne.s32.totalorder %s134, %s135
      %p144 = scmp.eq.s32.totalorder %s19, 0
      %p145 = por %p143, %p144
      %p146 = scmp.ne.s32.totalorder %s134, %s135
      %p147 = scmp.eq.s32.totalorder %s20, 1
      %p148 = por %p146, %p147
      %p150 = scmp.ne.s32.totalorder %s135, %s149
      %p151 = scmp.eq.s32.totalorder %s20, 0
      %p152 = por %p150, %p151
      %s154 = sadd.s32 %s153, 1
      %p157 = scmp.eq.s32.totalorder %s14, 1
      %p158 = scmp.ne.s32.totalorder %s153, %s155
      %p159 = scmp.eq.s32.totalorder %s14, 0
      %p160 = por %p158, %p159
      %p161 = scmp.ne.s32.totalorder %s153, %s155
      %p162 = scmp.eq.s32.totalorder %s19, 1
      %p163 = por %p161, %p162
      %p164 = scmp.ne.s32.totalorder %s155, %s156
      %p165 = scmp.eq.s32.totalorder %s19, 0
      %p166 = por %p164, %p165
      %p167 = scmp.ne.s32.totalorder %s155, %s156
      %p168 = scmp.eq.s32.totalorder %s20, 1
      %p169 = por %p167, %p168
      %p171 = scmp.ne.s32.totalorder %s156, %s170
      %p172 = scmp.eq.s32.totalorder %s20, 0
      %p173 = por %p171, %p172
      %s174 = ssub.s32 %s14, %s21
      %p175 = scmp.eq.s32.totalorder %s174, 0
      %s177 = sadd.s32 %s176, 1
      %s178 = scalar_select %p175, %s176, %s177
      %p181 = pneg %p175
      %p182 = scmp.eq.s32.totalorder %s14, 1
      %p183 = por %p181, %p182
      %p184 = scmp.ne.s32.totalorder %s176, %s179
      %p185 = scmp.eq.s32.totalorder %s14, 0
      %p186 = por %p184, %p185
      %p187 = scmp.ne.s32.totalorder %s176, %s179
      %p188 = scmp.eq.s32.totalorder %s19, 1
      %p189 = por %p187, %p188
      %p190 = scmp.ne.s32.totalorder %s179, %s180
      %p191 = scmp.eq.s32.totalorder %s19, 0
      %p192 = por %p190, %p191
      %p193 = scmp.ne.s32.totalorder %s179, %s180
      %p194 = scmp.eq.s32.totalorder %s20, 1
      %p195 = por %p193, %p194
      %p197 = scmp.ne.s32.totalorder %s180, %s196
      %p198 = scmp.eq.s32.totalorder %s20, 0
      %p199 = por %p197, %p198
      %p200 = scmp.le.s32.totalorder 1, %s14
      %p201 = scmp.lt.s32.totalorder %s14, 3
      %p202 = pnand %p200, %p201
      %p203 = pneg %p202
      // Predicated region
      $region9: #{feed_forward_net.1} parent=5 // pred_check
        _
      $region10: #{feed_forward_net.1} parent=5 // pred_check_branch
        %205 = sbr.rel (%p202) target = $region12
      $region11: #{feed_forward_net.1} parent=5 // pred_region
        %s206 = ssub.s32 %s14, 1
        // Predicated region
        $region13: #{feed_forward_net.1} parent=11 // pred_check
          %p207 = pneg %p61
        $region14: #{feed_forward_net.1} parent=11 // pred_check_branch
          %209 = sbr.rel (%p207) target = $region16
        $region15: #{feed_forward_net.1} parent=11 // pred_region
          _
        $region16: #{feed_forward_net.1} parent=11 // pred_fallthru
          _
        // Predicated region
        $region17: #{feed_forward_net.1} parent=11 // pred_check
          %p210 = pneg %p82
        $region18: #{feed_forward_net.1} parent=11 // pred_check_branch
          %212 = sbr.rel (%p210) target = $region20
        $region19: #{feed_forward_net.1} parent=11 // pred_region
          _
        $region20: #{feed_forward_net.1} parent=11 // pred_fallthru
          _
        // Predicated region
        $region21: #{feed_forward_net.1} parent=11 // pred_check
          %p213 = pneg %p103
        $region22: #{feed_forward_net.1} parent=11 // pred_check_branch
          %215 = sbr.rel (%p213) target = $region24
        $region23: #{feed_forward_net.1} parent=11 // pred_region
          _
        $region24: #{feed_forward_net.1} parent=11 // pred_fallthru
          _
        // Predicated region
        $region25: #{feed_forward_net.1} parent=11 // pred_check
          %p216 = pneg %p124
        $region26: #{feed_forward_net.1} parent=11 // pred_check_branch
          %218 = sbr.rel (%p216) target = $region28
        $region27: #{feed_forward_net.1} parent=11 // pred_region
          _
        $region28: #{feed_forward_net.1} parent=11 // pred_fallthru
          _
        // Predicated region
        $region29: #{feed_forward_net.1} parent=11 // pred_check
          %p219 = pneg %p145
        $region30: #{feed_forward_net.1} parent=11 // pred_check_branch
          %221 = sbr.rel (%p219) target = $region32
        $region31: #{feed_forward_net.1} parent=11 // pred_region
          %s223 = ssub.s32 8192, 8192
          %224 = vsyncadd [#allocation3], %s223
          %s225 = sshll.u32 [#allocation2], 4
          %s226 = int_to_ptr.vmem [resolvable:$true] %s225
          %231 = dma.hbm_to_vmem [thread:$0]  %s5, 8192, %s226, [#allocation3], 64, 64, 4
        $region32: #{feed_forward_net.1} parent=11 // pred_fallthru
          _
        // Predicated region
        $region33: #{feed_forward_net.1} parent=11 // pred_check
          %p232 = pneg %p166
        $region34: #{feed_forward_net.1} parent=11 // pred_check_branch
          %234 = sbr.rel (%p232) target = $region36
        $region35: #{feed_forward_net.1} parent=11 // pred_region
          _
        $region36: #{feed_forward_net.1} parent=11 // pred_fallthru
          _
      $region12: #{feed_forward_net.1} parent=5 // pred_fallthru
        _
      %p235 = scmp.lt.s32.totalorder %s14, 2
      // Predicated region
      $region37: #{feed_forward_net.1} parent=5 // pred_check
        %p236 = pneg %p235
      $region38: #{feed_forward_net.1} parent=5 // pred_check_branch
        %238 = sbr.rel (%p236) target = $region40
      $region39: #{feed_forward_net.1} parent=5 // pred_region
        // Predicated region
        $region41: #{feed_forward_net.1} parent=39 // pred_check
          %p239 = pneg %p34
        $region42: #{feed_forward_net.1} parent=39 // pred_check_branch
          %241 = sbr.rel (%p239) target = $region44
        $region43: #{feed_forward_net.1} parent=39 // pred_region
          %s242 = smul.u32 13, %s14
          %p243 = scmp.lt.s32.totalorder %s242, 25
          %s244 = scalar_select %p243, %s242, 25
          %s245 = smul.addr %s244, 8
          %s246 = scalar_lea.vmem %s0, %s245
          %s247 = smul.u32 13, %s14
        $region44: #{feed_forward_net.1} parent=39 // pred_fallthru
          _
      $region40: #{feed_forward_net.1} parent=5 // pred_fallthru
        _
      %p248 = scmp.le.s32.totalorder 1, %s14
      %p249 = scmp.lt.s32.totalorder %s14, 3
      %p250 = pnand %p248, %p249
      %p251 = pneg %p250
      // Predicated region
      $region45: #{feed_forward_net.1} parent=5 // pred_check
        _
      $region46: #{feed_forward_net.1} parent=5 // pred_check_branch
        %253 = sbr.rel (%p250) target = $region48
      $region47: #{feed_forward_net.1} parent=5 // pred_region
        %s254 = ssub.s32 %s14, 1
        // Predicated region
        $region49: #{feed_forward_net.1} parent=47 // pred_check
          %p255 = pneg %p145
        $region50: #{feed_forward_net.1} parent=47 // pred_check_branch
          %257 = sbr.rel (%p255) target = $region52
        $region51: #{feed_forward_net.1} parent=47 // pred_region
          %258 = dma.done [#allocation3], 8192
        $region52: #{feed_forward_net.1} parent=47 // pred_fallthru
          _
        %s259 = smul.u32 13, %s19
        %p260 = scmp.lt.s32.totalorder %s259, 25
        %s261 = scalar_select %p260, %s259, 25
        %s262 = smul.addr %s261, 8
        %s263 = scalar_lea.vmem %s0, %s262
        %p264 = pneg %p40
        %p265 = pneg %p37
        %p266 = pneg %p61
        %p267 = pneg %p58
        %p268 = pneg %p82
        %p269 = pneg %p79
        %p270 = pneg %p103
        %p271 = pneg %p100
        %p272 = pneg %p124
        %p273 = pneg %p121
        %p274 = pneg %p145
        %p275 = pneg %p142
        %p276 = pneg %p166
        %p277 = pneg %p163
        %p278 = pneg %p192
        %p279 = pneg %p189
        %s280 = smul.u32 13, %s19
        %p281 = scmp.lt.s32.totalorder %s280, 25
        %s282 = scalar_select %p281, %s280, 25
        %s283 = smul.addr %s282, 8
        %s284 = scalar_lea.vmem %s7, %s283
        %s285 = smul.u32 13, %s19
        %p286 = scmp.lt.s32.totalorder %s285, 25
        %s287 = scalar_select %p286, %s285, 25
        %s288 = smul.addr %s287, 8
        %s289 = scalar_lea.vmem %s0, %s288
        %s290 = smul.u32 13, %s19
        %s291 = smul.u32 13, %s19
        %p292 = scmp.lt.s32.totalorder %s291, 25
        %s293 = scalar_select %p292, %s291, 25
        %s294 = smul.addr %s293, 8
        %s295 = scalar_lea.vmem %s7, %s294
        %s296 = smul.u32 13, %s19
        %v298 = vld [vmem:[%s289] sm:$0xff]
        %v299 = vld [vmem:[%s289 + $0x8] sm:$0xff]
        %v300 = vld [vmem:[%s289 + $0x10] sm:$0xff]
        %v301 = vld [vmem:[%s289 + $0x18] sm:$0xff]
        %v302 = vld [vmem:[%s289 + $0x20] sm:$0xff]
        %v303 = vld [vmem:[%s289 + $0x28] sm:$0xff]
        %v304 = vld [vmem:[%s289 + $0x30] sm:$0xff]
        %v305 = vld [vmem:[%s289 + $0x38] sm:$0xff]
        %v306 = vld [vmem:[%s289 + $0x40] sm:$0xff]
        %v307 = vld [vmem:[%s289 + $0x48] sm:$0xff]
        %v308 = vld [vmem:[%s289 + $0x50] sm:$0xff]
        %v309 = vld [vmem:[%s289 + $0x58] sm:$0xff]
        %v310 = vld [vmem:[%s289 + $0x60] sm:$0xff]
        %v311 = vld [vmem:[%s1] sm:$0x7]
        %313 = vset.pattern.permute.xlu0 0
        %314 = vperm.xlu0 %313, %v298
        %v315 = vpop.permute.xlu0 %314
        %318 = vset.pattern.permute.xlu0 0
        %319 = vperm.xlu0 %318, %v299
        %v320 = vpop.permute.xlu0 %319
        %323 = vset.pattern.permute.xlu0 0
        %324 = vperm.xlu0 %323, %v300
        %v325 = vpop.permute.xlu0 %324
        %328 = vset.pattern.permute.xlu0 0
        %329 = vperm.xlu0 %328, %v301
        %v330 = vpop.permute.xlu0 %329
        %333 = vset.pattern.permute.xlu0 0
        %334 = vperm.xlu0 %333, %v302
        %v335 = vpop.permute.xlu0 %334
        %338 = vset.pattern.permute.xlu0 0
        %339 = vperm.xlu0 %338, %v303
        %v340 = vpop.permute.xlu0 %339
        %343 = vset.pattern.permute.xlu0 0
        %344 = vperm.xlu0 %343, %v304
        %v345 = vpop.permute.xlu0 %344
        %348 = vset.pattern.permute.xlu0 0
        %349 = vperm.xlu0 %348, %v305
        %v350 = vpop.permute.xlu0 %349
        %353 = vset.pattern.permute.xlu0 0
        %354 = vperm.xlu0 %353, %v306
        %v355 = vpop.permute.xlu0 %354
        %358 = vset.pattern.permute.xlu0 0
        %359 = vperm.xlu0 %358, %v307
        %v360 = vpop.permute.xlu0 %359
        %363 = vset.pattern.permute.xlu0 0
        %364 = vperm.xlu0 %363, %v308
        %v365 = vpop.permute.xlu0 %364
        %368 = vset.pattern.permute.xlu0 0
        %369 = vperm.xlu0 %368, %v309
        %v370 = vpop.permute.xlu0 %369
        %373 = vset.pattern.permute.xlu0 0
        %374 = vperm.xlu0 %373, %v310
        %v375 = vpop.permute.xlu0 %374
        %v377 = vlaneseq
        %v378 = vshrl.u32 %v377, 7
        %v379 = vsub.s32 0, %v378
        %v380 = vrot.slane %v311, %v379
        %v381 = vmul.f32 %v315, %v380
        %v382 = vmul.f32 %v320, %v380
        %v383 = vmul.f32 %v325, %v380
        %v384 = vmul.f32 %v330, %v380
        %v385 = vmul.f32 %v335, %v380
        %v386 = vmul.f32 %v340, %v380
        %v387 = vmul.f32 %v345, %v380
        %v388 = vmul.f32 %v350, %v380
        %v389 = vmul.f32 %v355, %v380
        %v390 = vmul.f32 %v360, %v380
        %v391 = vmul.f32 %v365, %v380
        %v392 = vmul.f32 %v370, %v380
        %v393 = vmul.f32 %v375, %v380
        %394 = vset.pattern.permute.xlu0 1
        %395 = vperm.xlu0 %394, %v298
        %v396 = vpop.permute.xlu0 %395
        %398 = vset.pattern.permute.xlu0 1
        %399 = vperm.xlu0 %398, %v299
        %v400 = vpop.permute.xlu0 %399
        %402 = vset.pattern.permute.xlu0 1
        %403 = vperm.xlu0 %402, %v300
        %v404 = vpop.permute.xlu0 %403
        %406 = vset.pattern.permute.xlu0 1
        %407 = vperm.xlu0 %406, %v301
        %v408 = vpop.permute.xlu0 %407
        %410 = vset.pattern.permute.xlu0 1
        %411 = vperm.xlu0 %410, %v302
        %v412 = vpop.permute.xlu0 %411
        %414 = vset.pattern.permute.xlu0 1
        %415 = vperm.xlu0 %414, %v303
        %v416 = vpop.permute.xlu0 %415
        %418 = vset.pattern.permute.xlu0 1
        %419 = vperm.xlu0 %418, %v304
        %v420 = vpop.permute.xlu0 %419
        %422 = vset.pattern.permute.xlu0 1
        %423 = vperm.xlu0 %422, %v305
        %v424 = vpop.permute.xlu0 %423
        %426 = vset.pattern.permute.xlu0 1
        %427 = vperm.xlu0 %426, %v306
        %v428 = vpop.permute.xlu0 %427
        %430 = vset.pattern.permute.xlu0 1
        %431 = vperm.xlu0 %430, %v307
        %v432 = vpop.permute.xlu0 %431
        %434 = vset.pattern.permute.xlu0 1
        %435 = vperm.xlu0 %434, %v308
        %v436 = vpop.permute.xlu0 %435
        %438 = vset.pattern.permute.xlu0 1
        %439 = vperm.xlu0 %438, %v309
        %v440 = vpop.permute.xlu0 %439
        %442 = vset.pattern.permute.xlu0 1
        %443 = vperm.xlu0 %442, %v310
        %v444 = vpop.permute.xlu0 %443
        %v446 = vlaneseq
        %v447 = vshrl.u32 %v446, 7
        %v448 = vsub.s32 1, %v447
        %v449 = vrot.slane %v311, %v448
        %v450 = vmul.f32 %v396, %v449
        %v451 = vmul.f32 %v400, %v449
        %v452 = vmul.f32 %v404, %v449
        %v453 = vmul.f32 %v408, %v449
        %v454 = vmul.f32 %v412, %v449
        %v455 = vmul.f32 %v416, %v449
        %v456 = vmul.f32 %v420, %v449
        %v457 = vmul.f32 %v424, %v449
        %v458 = vmul.f32 %v428, %v449
        %v459 = vmul.f32 %v432, %v449
        %v460 = vmul.f32 %v436, %v449
        %v461 = vmul.f32 %v440, %v449
        %v462 = vmul.f32 %v444, %v449
        %v463 = vadd.f32 %v381, %v450
        %v464 = vadd.f32 %v382, %v451
        %v465 = vadd.f32 %v383, %v452
        %v466 = vadd.f32 %v384, %v453
        %v467 = vadd.f32 %v385, %v454
        %v468 = vadd.f32 %v386, %v455
        %v469 = vadd.f32 %v387, %v456
        %v470 = vadd.f32 %v388, %v457
        %v471 = vadd.f32 %v389, %v458
        %v472 = vadd.f32 %v390, %v459
        %v473 = vadd.f32 %v391, %v460
        %v474 = vadd.f32 %v392, %v461
        %v475 = vadd.f32 %v393, %v462
        %476 = vset.pattern.permute.xlu0 2
        %477 = vperm.xlu0 %476, %v298
        %v478 = vpop.permute.xlu0 %477
        %480 = vset.pattern.permute.xlu0 2
        %481 = vperm.xlu0 %480, %v299
        %v482 = vpop.permute.xlu0 %481
        %484 = vset.pattern.permute.xlu0 2
        %485 = vperm.xlu0 %484, %v300
        %v486 = vpop.permute.xlu0 %485
        %488 = vset.pattern.permute.xlu0 2
        %489 = vperm.xlu0 %488, %v301
        %v490 = vpop.permute.xlu0 %489
        %492 = vset.pattern.permute.xlu0 2
        %493 = vperm.xlu0 %492, %v302
        %v494 = vpop.permute.xlu0 %493
        %496 = vset.pattern.permute.xlu0 2
        %497 = vperm.xlu0 %496, %v303
        %v498 = vpop.permute.xlu0 %497
        %500 = vset.pattern.permute.xlu0 2
        %501 = vperm.xlu0 %500, %v304
        %v502 = vpop.permute.xlu0 %501
        %504 = vset.pattern.permute.xlu0 2
        %505 = vperm.xlu0 %504, %v305
        %v506 = vpop.permute.xlu0 %505
        %508 = vset.pattern.permute.xlu0 2
        %509 = vperm.xlu0 %508, %v306
        %v510 = vpop.permute.xlu0 %509
        %512 = vset.pattern.permute.xlu0 2
        %513 = vperm.xlu0 %512, %v307
        %v514 = vpop.permute.xlu0 %513
        %516 = vset.pattern.permute.xlu0 2
        %517 = vperm.xlu0 %516, %v308
        %v518 = vpop.permute.xlu0 %517
        %520 = vset.pattern.permute.xlu0 2
        %521 = vperm.xlu0 %520, %v309
        %v522 = vpop.permute.xlu0 %521
        %524 = vset.pattern.permute.xlu0 2
        %525 = vperm.xlu0 %524, %v310
        %v526 = vpop.permute.xlu0 %525
        %v528 = vlaneseq
        %v529 = vshrl.u32 %v528, 7
        %v530 = vsub.s32 2, %v529
        %v531 = vrot.slane %v311, %v530
        %v532 = vmul.f32 %v478, %v531
        %v533 = vmul.f32 %v482, %v531
        %v534 = vmul.f32 %v486, %v531
        %v535 = vmul.f32 %v490, %v531
        %v536 = vmul.f32 %v494, %v531
        %v537 = vmul.f32 %v498, %v531
        %v538 = vmul.f32 %v502, %v531
        %v539 = vmul.f32 %v506, %v531
        %v540 = vmul.f32 %v510, %v531
        %v541 = vmul.f32 %v514, %v531
        %v542 = vmul.f32 %v518, %v531
        %v543 = vmul.f32 %v522, %v531
        %v544 = vmul.f32 %v526, %v531
        %v545 = vadd.f32 %v463, %v532
        %v546 = vadd.f32 %v464, %v533
        %v547 = vadd.f32 %v465, %v534
        %v548 = vadd.f32 %v466, %v535
        %v549 = vadd.f32 %v467, %v536
        %v550 = vadd.f32 %v468, %v537
        %v551 = vadd.f32 %v469, %v538
        %v552 = vadd.f32 %v470, %v539
        %v553 = vadd.f32 %v471, %v540
        %v554 = vadd.f32 %v472, %v541
        %v555 = vadd.f32 %v473, %v542
        %v556 = vadd.f32 %v474, %v543
        %v557 = vadd.f32 %v475, %v544
        %v558 = vld [vmem:[%s2] sm:$0x1]
        %v560 = vlaneseq
        %v561 = vshrl.u32 %v560, 7
        %v562 = vsub.s32 0, %v561
        %v563 = vrot.slane %v558, %v562
        %v565 = vadd.f32 %v545, %v563
        %v566 = vadd.f32 %v546, %v563
        %v567 = vadd.f32 %v547, %v563
        %v568 = vadd.f32 %v548, %v563
        %v569 = vadd.f32 %v549, %v563
        %v570 = vadd.f32 %v550, %v563
        %v571 = vadd.f32 %v551, %v563
        %v572 = vadd.f32 %v552, %v563
        %v573 = vadd.f32 %v553, %v563
        %v574 = vadd.f32 %v554, %v563
        %v575 = vadd.f32 %v555, %v563
        %v576 = vadd.f32 %v556, %v563
        %v577 = vadd.f32 %v557, %v563
        %v578 = vmax.f32 %v565, 0.0
        %v579 = vmax.f32 %v566, 0.0
        %v580 = vmax.f32 %v567, 0.0
        %v581 = vmax.f32 %v568, 0.0
        %v582 = vmax.f32 %v569, 0.0
        %v583 = vmax.f32 %v570, 0.0
        %v584 = vmax.f32 %v571, 0.0
        %v585 = vmax.f32 %v572, 0.0
        %v586 = vmax.f32 %v573, 0.0
        %v587 = vmax.f32 %v574, 0.0
        %v588 = vmax.f32 %v575, 0.0
        %v589 = vmax.f32 %v576, 0.0
        %v590 = vmax.f32 %v577, 0.0
        %v591 = vpack.c.bf16 %v579, %v578
        %v592 = vpack.c.bf16 %v581, %v580
        %v593 = vpack.c.bf16 %v583, %v582
        %v594 = vpack.c.bf16 %v585, %v584
        %v595 = vpack.c.bf16 %v587, %v586
        %v596 = vpack.c.bf16 %v589, %v588
        %v597 = vpack.c.bf16 %v590, %v590
        %v598 = vld [vmem:[%s3] sm:$0xff]
        %v599 = vld [vmem:[%s3 + $0x8] sm:$0xff]
        %v600 = vld [vmem:[%s3 + $0x10] sm:$0xff]
        %v601 = vld [vmem:[%s3 + $0x18] sm:$0xff]
        %v602 = vld [vmem:[%s3 + $0x20] sm:$0xff]
        %v603 = vld [vmem:[%s3 + $0x28] sm:$0xff]
        %v604 = vld [vmem:[%s3 + $0x30] sm:$0xff]
        %v605 = vld [vmem:[%s3 + $0x38] sm:$0xff]
        %v606 = vld [vmem:[%s3 + $0x40] sm:$0xff]
        %v607 = vld [vmem:[%s3 + $0x48] sm:$0xff]
        %v608 = vld [vmem:[%s3 + $0x50] sm:$0xff]
        %v609 = vld [vmem:[%s3 + $0x58] sm:$0xff]
        %v610 = vld [vmem:[%s3 + $0x60] sm:$0xff]
        %v611 = vld [vmem:[%s3 + $0x68] sm:$0xff]
        %v612 = vld [vmem:[%s3 + $0x70] sm:$0xff]
        %v613 = vld [vmem:[%s3 + $0x78] sm:$0xff]
        %v614 = vld [vmem:[%s4] sm:$0x3]
        %v615 = vld [vmem:[#allocation2] sm:$0xf]
        %v616 = vld [vmem:[#allocation2 + $0x4] sm:$0xf]
        %v617 = vld [vmem:[#allocation2 + $0x8] sm:$0xf]
        %v618 = vld [vmem:[#allocation2 + $0xc] sm:$0xf]
        %v619 = vld [vmem:[#allocation2 + $0x10] sm:$0xf]
        %v620 = vld [vmem:[#allocation2 + $0x14] sm:$0xf]
        %v621 = vld [vmem:[#allocation2 + $0x18] sm:$0xf]
        %v622 = vld [vmem:[#allocation2 + $0x1c] sm:$0xf]
        %v623 = vld [vmem:[#allocation2 + $0x20] sm:$0xf]
        %v624 = vld [vmem:[#allocation2 + $0x24] sm:$0xf]
        %v625 = vld [vmem:[#allocation2 + $0x28] sm:$0xf]
        %v626 = vld [vmem:[#allocation2 + $0x2c] sm:$0xf]
        %v627 = vld [vmem:[#allocation2 + $0x30] sm:$0xf]
        %v628 = vld [vmem:[#allocation2 + $0x34] sm:$0xf]
        %v629 = vld [vmem:[#allocation2 + $0x38] sm:$0xf]
        %v630 = vld [vmem:[#allocation2 + $0x3c] sm:$0xf]
        %v631 = vld [vmem:[#allocation2 + $0x40] sm:$0xf]
        %v632 = vld [vmem:[#allocation2 + $0x44] sm:$0xf]
        %v633 = vld [vmem:[#allocation2 + $0x48] sm:$0xf]
        %v634 = vld [vmem:[#allocation2 + $0x4c] sm:$0xf]
        %v635 = vld [vmem:[#allocation2 + $0x50] sm:$0xf]
        %v636 = vld [vmem:[#allocation2 + $0x54] sm:$0xf]
        %v637 = vld [vmem:[#allocation2 + $0x58] sm:$0xf]
        %v638 = vld [vmem:[#allocation2 + $0x5c] sm:$0xf]
        %v639 = vld [vmem:[#allocation2 + $0x60] sm:$0xf]
        %v640 = vld [vmem:[#allocation2 + $0x64] sm:$0xf]
        %v641 = vld [vmem:[#allocation2 + $0x68] sm:$0xf]
        %v642 = vld [vmem:[#allocation2 + $0x6c] sm:$0xf]
        %v643 = vld [vmem:[#allocation2 + $0x70] sm:$0xf]
        %v644 = vld [vmem:[#allocation2 + $0x74] sm:$0xf]
        %v645 = vld [vmem:[#allocation2 + $0x78] sm:$0xf]
        %v646 = vld [vmem:[#allocation2 + $0x7c] sm:$0xf]
        %v648 = vlaneseq
        %v649 = vshrl.u32 %v648, 7
        %v650 = vsub.s32 0, %v649
        %v651 = vrot.slane %v614, %v650
        %v652 = vlaneseq
        %v653 = vshrl.u32 %v652, 7
        %v654 = vsub.s32 1, %v653
        %v655 = vrot.slane %v614, %v654
        %v674 = vunpack.c.l.b16 %v598
        %v675 = vunpack.c.h.b16 %v598
        %v676 = vunpack.c.l.b16 %v599
        %v677 = vunpack.c.h.b16 %v599
        %v678 = vunpack.c.l.b16 %v600
        %v679 = vunpack.c.h.b16 %v600
        %v680 = vunpack.c.l.b16 %v601
        %v681 = vunpack.c.h.b16 %v601
        %v682 = vunpack.c.l.b16 %v602
        %v683 = vunpack.c.h.b16 %v602
        %v684 = vunpack.c.l.b16 %v603
        %v685 = vunpack.c.h.b16 %v603
        %v686 = vunpack.c.l.b16 %v604
        %v687 = vunpack.c.h.b16 %v604
        %v688 = vunpack.c.l.b16 %v605
        %v689 = vunpack.c.h.b16 %v605
        %v690 = vunpack.c.l.b16 %v606
        %v691 = vunpack.c.h.b16 %v606
        %v692 = vunpack.c.l.b16 %v607
        %v693 = vunpack.c.h.b16 %v607
        %v694 = vunpack.c.l.b16 %v608
        %v695 = vunpack.c.h.b16 %v608
        %v696 = vunpack.c.l.b16 %v609
        %v697 = vunpack.c.h.b16 %v609
        %v698 = vunpack.c.l.b16 %v610
        %v699 = vunpack.c.h.b16 %v610
        %v700 = vunpack.c.l.b16 %v611
        %v701 = vunpack.c.h.b16 %v611
        %v702 = vunpack.c.l.b16 %v612
        %v703 = vunpack.c.h.b16 %v612
        %v704 = vunpack.c.l.b16 %v613
        %v705 = vunpack.c.h.b16 %v613
        %v706 = vpack.c.b16 %v676, %v674
        %v707 = vpack.c.b16 %v677, %v675
        %v708 = vpack.c.b16 %v680, %v678
        %v709 = vpack.c.b16 %v681, %v679
        %v710 = vpack.c.b16 %v684, %v682
        %v711 = vpack.c.b16 %v685, %v683
        %v712 = vpack.c.b16 %v688, %v686
        %v713 = vpack.c.b16 %v689, %v687
        %v714 = vpack.c.b16 %v692, %v690
        %v715 = vpack.c.b16 %v693, %v691
        %v716 = vpack.c.b16 %v696, %v694
        %v717 = vpack.c.b16 %v697, %v695
        %v718 = vpack.c.b16 %v700, %v698
        %v719 = vpack.c.b16 %v701, %v699
        %v720 = vpack.c.b16 %v704, %v702
        %v721 = vpack.c.b16 %v705, %v703
        %738 = vmatprep.subr.bf16.mxu0 %v707
        %739 = vmatpush1.bf16.msra.mxu0 %v706
        %740 = vmatprep.subr.bf16.mxu0 %v709
        %741 = vmatpush1.bf16.msra.mxu0 %v708
        %742 = vmatprep.subr.bf16.mxu0 %v711
        %743 = vmatpush1.bf16.msra.mxu0 %v710
        %744 = vmatprep.subr.bf16.mxu0 %v713
        %745 = vmatpush1.bf16.msra.mxu0 %v712
        %746 = vmatprep.subr.bf16.mxu0 %v715
        %747 = vmatpush1.bf16.msra.mxu0 %v714
        %748 = vmatprep.subr.bf16.mxu0 %v717
        %749 = vmatpush1.bf16.msra.mxu0 %v716
        %750 = vmatprep.subr.bf16.mxu0 %v719
        %751 = vmatpush1.bf16.msra.mxu0 %v718
        %752 = vmatprep.subr.bf16.mxu0 %v721
        %753 = vmatpush1.bf16.msra.mxu0 %v720
        %754 = vmatprep.subr.bf16.mxu0 0
        %755 = vmatpush1.bf16.msra.mxu0 0
        %756 = vmatprep.subr.bf16.mxu0 0
        %757 = vmatpush1.bf16.msra.mxu0 0
        %758 = vmatprep.subr.bf16.mxu0 0
        %759 = vmatpush1.bf16.msra.mxu0 0
        %760 = vmatprep.subr.bf16.mxu0 0
        %761 = vmatpush1.bf16.msra.mxu0 0
        %762 = vmatprep.subr.bf16.mxu0 0
        %763 = vmatpush1.bf16.msra.mxu0 0
        %764 = vmatprep.subr.bf16.mxu0 0
        %765 = vmatpush1.bf16.msra.mxu0 0
        %766 = vmatprep.subr.bf16.mxu0 0
        %767 = vmatpush1.bf16.msra.mxu0 0
        %768 = vmatprep.subr.bf16.mxu0 0
        %769 = vmatpush1.bf16.msra.mxu0 0
        %770 = vmatprep.mubr.bf16.mxu0 0
        %771 = vmatmul.mubr.bf16.gmra.mrb[0].mxu0 %v591
        %v772 = vpop.f32.mrb[0].mxu0
        %v773 = vadd.f32 %v651, %v772
        %v774 = vpop.f32.mrb[0].mxu0
        %v775 = vadd.f32 %v655, %v774
        %v776 = vpop.f32.mrb[0].mxu0
        %v777 = vadd.f32 %v651, %v776
        %v778 = vpop.f32.mrb[0].mxu0
        %v779 = vadd.f32 %v655, %v778
        %780 = vmatprep.mubr.bf16.mxu0 0
        %781 = vmatmul.mubr.bf16.gmra.mrb[0].mxu0 %v592
        %v782 = vpop.f32.mrb[0].mxu0
        %v783 = vadd.f32 %v651, %v782
        %v784 = vpop.f32.mrb[0].mxu0
        %v785 = vadd.f32 %v655, %v784
        %v786 = vpop.f32.mrb[0].mxu0
        %v787 = vadd.f32 %v651, %v786
        %v788 = vpop.f32.mrb[0].mxu0
        %v789 = vadd.f32 %v655, %v788
        %790 = vmatprep.mubr.bf16.mxu0 0
        %791 = vmatmul.mubr.bf16.gmra.mrb[0].mxu0 %v593
        %v792 = vpop.f32.mrb[0].mxu0
        %v793 = vadd.f32 %v651, %v792
        %v794 = vpop.f32.mrb[0].mxu0
        %v795 = vadd.f32 %v655, %v794
        %v796 = vpop.f32.mrb[0].mxu0
        %v797 = vadd.f32 %v651, %v796
        %v798 = vpop.f32.mrb[0].mxu0
        %v799 = vadd.f32 %v655, %v798
        %800 = vmatprep.mubr.bf16.mxu0 0
        %801 = vmatmul.mubr.bf16.gmra.mrb[0].mxu0 %v594
        %v802 = vpop.f32.mrb[0].mxu0
        %v803 = vadd.f32 %v651, %v802
        %v804 = vpop.f32.mrb[0].mxu0
        %v805 = vadd.f32 %v655, %v804
        %v806 = vpop.f32.mrb[0].mxu0
        %v807 = vadd.f32 %v651, %v806
        %v808 = vpop.f32.mrb[0].mxu0
        %v809 = vadd.f32 %v655, %v808
        %810 = vmatprep.mubr.bf16.mxu0 0
        %811 = vmatmul.mubr.bf16.gmra.mrb[0].mxu0 %v595
        %v812 = vpop.f32.mrb[0].mxu0
        %v813 = vadd.f32 %v651, %v812
        %v814 = vpop.f32.mrb[0].mxu0
        %v815 = vadd.f32 %v655, %v814
        %v816 = vpop.f32.mrb[0].mxu0
        %v817 = vadd.f32 %v651, %v816
        %v818 = vpop.f32.mrb[0].mxu0
        %v819 = vadd.f32 %v655, %v818
        %820 = vmatprep.mubr.bf16.mxu0 0
        %821 = vmatmul.mubr.bf16.gmra.mrb[0].mxu0 %v596
        %v822 = vpop.f32.mrb[0].mxu0
        %v823 = vadd.f32 %v651, %v822
        %v824 = vpop.f32.mrb[0].mxu0
        %v825 = vadd.f32 %v655, %v824
        %v826 = vpop.f32.mrb[0].mxu0
        %v827 = vadd.f32 %v651, %v826
        %v828 = vpop.f32.mrb[0].mxu0
        %v829 = vadd.f32 %v655, %v828
        %830 = vmatprep.mubr.bf16.mxu0 0
        %831 = vmatmul.mubr.bf16.gmra.mrb[0].mxu0 %v597
        %v832 = vpop.f32.mrb[0].mxu0
        %v833 = vadd.f32 %v651, %v832
        %v834 = vpop.f32.mrb[0].mxu0
        %v835 = vadd.f32 %v655, %v834
        %v836 = vpop.f32.mrb[0].mxu0
        %v837 = vpop.f32.mrb[0].mxu0
        %838 = vdwg.mxu0
        %v839 = vmax.f32 %v773, 0.0
        %v840 = vmax.f32 %v775, 0.0
        %v841 = vmax.f32 %v777, 0.0
        %v842 = vmax.f32 %v779, 0.0
        %v843 = vmax.f32 %v783, 0.0
        %v844 = vmax.f32 %v785, 0.0
        %v845 = vmax.f32 %v787, 0.0
        %v846 = vmax.f32 %v789, 0.0
        %v847 = vmax.f32 %v793, 0.0
        %v848 = vmax.f32 %v795, 0.0
        %v849 = vmax.f32 %v797, 0.0
        %v850 = vmax.f32 %v799, 0.0
        %v851 = vmax.f32 %v803, 0.0
        %v852 = vmax.f32 %v805, 0.0
        %v853 = vmax.f32 %v807, 0.0
        %v854 = vmax.f32 %v809, 0.0
        %v855 = vmax.f32 %v813, 0.0
        %v856 = vmax.f32 %v815, 0.0
        %v857 = vmax.f32 %v817, 0.0
        %v858 = vmax.f32 %v819, 0.0
        %v859 = vmax.f32 %v823, 0.0
        %v860 = vmax.f32 %v825, 0.0
        %v861 = vmax.f32 %v827, 0.0
        %v862 = vmax.f32 %v829, 0.0
        %v863 = vmax.f32 %v833, 0.0
        %v864 = vmax.f32 %v835, 0.0
        %v865 = vpack.c.bf16 %v841, %v839
        %v866 = vpack.c.bf16 %v842, %v840
        %v867 = vpack.c.bf16 %v845, %v843
        %v868 = vpack.c.bf16 %v846, %v844
        %v869 = vpack.c.bf16 %v849, %v847
        %v870 = vpack.c.bf16 %v850, %v848
        %v871 = vpack.c.bf16 %v853, %v851
        %v872 = vpack.c.bf16 %v854, %v852
        %v873 = vpack.c.bf16 %v857, %v855
        %v874 = vpack.c.bf16 %v858, %v856
        %v875 = vpack.c.bf16 %v861, %v859
        %v876 = vpack.c.bf16 %v862, %v860
        %v877 = vpack.c.bf16 %v863, %v863
        %v878 = vpack.c.bf16 %v864, %v864
        %s879 = scalar_lea.vmem %s3, 128
        %v880 = vld [vmem:[%s879] sm:$0xff]
        %v881 = vld [vmem:[%s879 + $0x8] sm:$0xff]
        %v882 = vld [vmem:[%s879 + $0x10] sm:$0xff]
        %v883 = vld [vmem:[%s879 + $0x18] sm:$0xff]
        %v884 = vld [vmem:[%s879 + $0x20] sm:$0xff]
        %v885 = vld [vmem:[%s879 + $0x28] sm:$0xff]
        %v886 = vld [vmem:[%s879 + $0x30] sm:$0xff]
        %v887 = vld [vmem:[%s879 + $0x38] sm:$0xff]
        %v888 = vld [vmem:[%s879 + $0x40] sm:$0xff]
        %v889 = vld [vmem:[%s879 + $0x48] sm:$0xff]
        %v890 = vld [vmem:[%s879 + $0x50] sm:$0xff]
        %v891 = vld [vmem:[%s879 + $0x58] sm:$0xff]
        %v892 = vld [vmem:[%s879 + $0x60] sm:$0xff]
        %v893 = vld [vmem:[%s879 + $0x68] sm:$0xff]
        %v894 = vld [vmem:[%s879 + $0x70] sm:$0xff]
        %v895 = vld [vmem:[%s879 + $0x78] sm:$0xff]
        %s896 = scalar_lea.vmem %s4, 2
        %v897 = vld [vmem:[%s896] sm:$0x3]
        %s898 = scalar_lea.vmem [#allocation2], 128
        %v899 = vld [vmem:[%s898] sm:$0xf]
        %v900 = vld [vmem:[%s898 + $0x4] sm:$0xf]
        %v901 = vld [vmem:[%s898 + $0x8] sm:$0xf]
        %v902 = vld [vmem:[%s898 + $0xc] sm:$0xf]
        %v903 = vld [vmem:[%s898 + $0x10] sm:$0xf]
        %v904 = vld [vmem:[%s898 + $0x14] sm:$0xf]
        %v905 = vld [vmem:[%s898 + $0x18] sm:$0xf]
        %v906 = vld [vmem:[%s898 + $0x1c] sm:$0xf]
        %v907 = vld [vmem:[%s898 + $0x20] sm:$0xf]
        %v908 = vld [vmem:[%s898 + $0x24] sm:$0xf]
        %v909 = vld [vmem:[%s898 + $0x28] sm:$0xf]
        %v910 = vld [vmem:[%s898 + $0x2c] sm:$0xf]
        %v911 = vld [vmem:[%s898 + $0x30] sm:$0xf]
        %v912 = vld [vmem:[%s898 + $0x34] sm:$0xf]
        %v913 = vld [vmem:[%s898 + $0x38] sm:$0xf]
        %v914 = vld [vmem:[%s898 + $0x3c] sm:$0xf]
        %v915 = vld [vmem:[%s898 + $0x40] sm:$0xf]
        %v916 = vld [vmem:[%s898 + $0x44] sm:$0xf]
        %v917 = vld [vmem:[%s898 + $0x48] sm:$0xf]
        %v918 = vld [vmem:[%s898 + $0x4c] sm:$0xf]
        %v919 = vld [vmem:[%s898 + $0x50] sm:$0xf]
        %v920 = vld [vmem:[%s898 + $0x54] sm:$0xf]
        %v921 = vld [vmem:[%s898 + $0x58] sm:$0xf]
        %v922 = vld [vmem:[%s898 + $0x5c] sm:$0xf]
        %v923 = vld [vmem:[%s898 + $0x60] sm:$0xf]
        %v924 = vld [vmem:[%s898 + $0x64] sm:$0xf]
        %v925 = vld [vmem:[%s898 + $0x68] sm:$0xf]
        %v926 = vld [vmem:[%s898 + $0x6c] sm:$0xf]
        %v927 = vld [vmem:[%s898 + $0x70] sm:$0xf]
        %v928 = vld [vmem:[%s898 + $0x74] sm:$0xf]
        %v929 = vld [vmem:[%s898 + $0x78] sm:$0xf]
        %v930 = vld [vmem:[%s898 + $0x7c] sm:$0xf]
        %v932 = vlaneseq
        %v933 = vshrl.u32 %v932, 7
        %v934 = vsub.s32 0, %v933
        %v935 = vrot.slane %v897, %v934
        %v936 = vlaneseq
        %v937 = vshrl.u32 %v936, 7
        %v938 = vsub.s32 1, %v937
        %v939 = vrot.slane %v897, %v938
        %v958 = vunpack.c.l.b16 %v880
        %v959 = vunpack.c.h.b16 %v880
        %v960 = vunpack.c.l.b16 %v881
        %v961 = vunpack.c.h.b16 %v881
        %v962 = vunpack.c.l.b16 %v882
        %v963 = vunpack.c.h.b16 %v882
        %v964 = vunpack.c.l.b16 %v883
        %v965 = vunpack.c.h.b16 %v883
        %v966 = vunpack.c.l.b16 %v884
        %v967 = vunpack.c.h.b16 %v884
        %v968 = vunpack.c.l.b16 %v885
        %v969 = vunpack.c.h.b16 %v885
        %v970 = vunpack.c.l.b16 %v886
        %v971 = vunpack.c.h.b16 %v886
        %v972 = vunpack.c.l.b16 %v887
        %v973 = vunpack.c.h.b16 %v887
        %v974 = vunpack.c.l.b16 %v888
        %v975 = vunpack.c.h.b16 %v888
        %v976 = vunpack.c.l.b16 %v889
        %v977 = vunpack.c.h.b16 %v889
        %v978 = vunpack.c.l.b16 %v890
        %v979 = vunpack.c.h.b16 %v890
        %v980 = vunpack.c.l.b16 %v891
        %v981 = vunpack.c.h.b16 %v891
        %v982 = vunpack.c.l.b16 %v892
        %v983 = vunpack.c.h.b16 %v892
        %v984 = vunpack.c.l.b16 %v893
        %v985 = vunpack.c.h.b16 %v893
        %v986 = vunpack.c.l.b16 %v894
        %v987 = vunpack.c.h.b16 %v894
        %v988 = vunpack.c.l.b16 %v895
        %v989 = vunpack.c.h.b16 %v895
        %v990 = vpack.c.b16 %v960, %v958
        %v991 = vpack.c.b16 %v961, %v959
        %v992 = vpack.c.b16 %v964, %v962
        %v993 = vpack.c.b16 %v965, %v963
        %v994 = vpack.c.b16 %v968, %v966
        %v995 = vpack.c.b16 %v969, %v967
        %v996 = vpack.c.b16 %v972, %v970
        %v997 = vpack.c.b16 %v973, %v971
        %v998 = vpack.c.b16 %v976, %v974
        %v999 = vpack.c.b16 %v977, %v975
        %v1000 = vpack.c.b16 %v980, %v978
        %v1001 = vpack.c.b16 %v981, %v979
        %v1002 = vpack.c.b16 %v984, %v982
        %v1003 = vpack.c.b16 %v985, %v983
        %v1004 = vpack.c.b16 %v988, %v986
        %v1005 = vpack.c.b16 %v989, %v987
        %1022 = vmatprep.subr.bf16.mxu0 %v991
        %1023 = vmatpush1.bf16.msra.mxu0 %v990
        %1024 = vmatprep.subr.bf16.mxu0 %v993
        %1025 = vmatpush1.bf16.msra.mxu0 %v992
        %1026 = vmatprep.subr.bf16.mxu0 %v995
        %1027 = vmatpush1.bf16.msra.mxu0 %v994
        %1028 = vmatprep.subr.bf16.mxu0 %v997
        %1029 = vmatpush1.bf16.msra.mxu0 %v996
        %1030 = vmatprep.subr.bf16.mxu0 %v999
        %1031 = vmatpush1.bf16.msra.mxu0 %v998
        %1032 = vmatprep.subr.bf16.mxu0 %v1001
        %1033 = vmatpush1.bf16.msra.mxu0 %v1000
        %1034 = vmatprep.subr.bf16.mxu0 %v1003
        %1035 = vmatpush1.bf16.msra.mxu0 %v1002
        %1036 = vmatprep.subr.bf16.mxu0 %v1005
        %1037 = vmatpush1.bf16.msra.mxu0 %v1004
        %1038 = vmatprep.subr.bf16.mxu0 0
        %1039 = vmatpush1.bf16.msra.mxu0 0
        %1040 = vmatprep.subr.bf16.mxu0 0
        %1041 = vmatpush1.bf16.msra.mxu0 0
        %1042 = vmatprep.subr.bf16.mxu0 0
        %1043 = vmatpush1.bf16.msra.mxu0 0
        %1044 = vmatprep.subr.bf16.mxu0 0
        %1045 = vmatpush1.bf16.msra.mxu0 0
        %1046 = vmatprep.subr.bf16.mxu0 0
        %1047 = vmatpush1.bf16.msra.mxu0 0
        %1048 = vmatprep.subr.bf16.mxu0 0
        %1049 = vmatpush1.bf16.msra.mxu0 0
        %1050 = vmatprep.subr.bf16.mxu0 0
        %1051 = vmatpush1.bf16.msra.mxu0 0
        %1052 = vmatprep.subr.bf16.mxu0 0
        %1053 = vmatpush1.bf16.msra.mxu0 0
        %1054 = vmatprep.mubr.bf16.mxu0 0
        %1055 = vmatmul.mubr.bf16.gmra.mrb[0].mxu0 %v591
        %v1056 = vpop.f32.mrb[0].mxu0
        %v1057 = vadd.f32 %v935, %v1056
        %v1058 = vpop.f32.mrb[0].mxu0
        %v1059 = vadd.f32 %v939, %v1058
        %v1060 = vpop.f32.mrb[0].mxu0
        %v1061 = vadd.f32 %v935, %v1060
        %v1062 = vpop.f32.mrb[0].mxu0
        %v1063 = vadd.f32 %v939, %v1062
        %1064 = vmatprep.mubr.bf16.mxu0 0
        %1065 = vmatmul.mubr.bf16.gmra.mrb[0].mxu0 %v592
        %v1066 = vpop.f32.mrb[0].mxu0
        %v1067 = vadd.f32 %v935, %v1066
        %v1068 = vpop.f32.mrb[0].mxu0
        %v1069 = vadd.f32 %v939, %v1068
        %v1070 = vpop.f32.mrb[0].mxu0
        %v1071 = vadd.f32 %v935, %v1070
        %v1072 = vpop.f32.mrb[0].mxu0
        %v1073 = vadd.f32 %v939, %v1072
        %1074 = vmatprep.mubr.bf16.mxu0 0
        %1075 = vmatmul.mubr.bf16.gmra.mrb[0].mxu0 %v593
        %v1076 = vpop.f32.mrb[0].mxu0
        %v1077 = vadd.f32 %v935, %v1076
        %v1078 = vpop.f32.mrb[0].mxu0
        %v1079 = vadd.f32 %v939, %v1078
        %v1080 = vpop.f32.mrb[0].mxu0
        %v1081 = vadd.f32 %v935, %v1080
        %v1082 = vpop.f32.mrb[0].mxu0
        %v1083 = vadd.f32 %v939, %v1082
        %1084 = vmatprep.mubr.bf16.mxu0 0
        %1085 = vmatmul.mubr.bf16.gmra.mrb[0].mxu0 %v594
        %v1086 = vpop.f32.mrb[0].mxu0
        %v1087 = vadd.f32 %v935, %v1086
        %v1088 = vpop.f32.mrb[0].mxu0
        %v1089 = vadd.f32 %v939, %v1088
        %v1090 = vpop.f32.mrb[0].mxu0
        %v1091 = vadd.f32 %v935, %v1090
        %v1092 = vpop.f32.mrb[0].mxu0
        %v1093 = vadd.f32 %v939, %v1092
        %1094 = vmatprep.mubr.bf16.mxu0 0
        %1095 = vmatmul.mubr.bf16.gmra.mrb[0].mxu0 %v595
        %v1096 = vpop.f32.mrb[0].mxu0
        %v1097 = vadd.f32 %v935, %v1096
        %v1098 = vpop.f32.mrb[0].mxu0
        %v1099 = vadd.f32 %v939, %v1098
        %v1100 = vpop.f32.mrb[0].mxu0
        %v1101 = vadd.f32 %v935, %v1100
        %v1102 = vpop.f32.mrb[0].mxu0
        %v1103 = vadd.f32 %v939, %v1102
        %1104 = vmatprep.mubr.bf16.mxu0 0
        %1105 = vmatmul.mubr.bf16.gmra.mrb[0].mxu0 %v596
        %v1106 = vpop.f32.mrb[0].mxu0
        %v1107 = vadd.f32 %v935, %v1106
        %v1108 = vpop.f32.mrb[0].mxu0
        %v1109 = vadd.f32 %v939, %v1108
        %v1110 = vpop.f32.mrb[0].mxu0
        %v1111 = vadd.f32 %v935, %v1110
        %v1112 = vpop.f32.mrb[0].mxu0
        %v1113 = vadd.f32 %v939, %v1112
        %1114 = vmatprep.mubr.bf16.mxu0 0
        %1115 = vmatmul.mubr.bf16.gmra.mrb[0].mxu0 %v597
        %v1116 = vpop.f32.mrb[0].mxu0
        %v1117 = vadd.f32 %v935, %v1116
        %v1118 = vpop.f32.mrb[0].mxu0
        %v1119 = vadd.f32 %v939, %v1118
        %v1120 = vpop.f32.mrb[0].mxu0
        %v1121 = vpop.f32.mrb[0].mxu0
        %1122 = vdwg.mxu0
        %v1123 = vmax.f32 %v1057, 0.0
        %v1124 = vmax.f32 %v1059, 0.0
        %v1125 = vmax.f32 %v1061, 0.0
        %v1126 = vmax.f32 %v1063, 0.0
        %v1127 = vmax.f32 %v1067, 0.0
        %v1128 = vmax.f32 %v1069, 0.0
        %v1129 = vmax.f32 %v1071, 0.0
        %v1130 = vmax.f32 %v1073, 0.0
        %v1131 = vmax.f32 %v1077, 0.0
        %v1132 = vmax.f32 %v1079, 0.0
        %v1133 = vmax.f32 %v1081, 0.0
        %v1134 = vmax.f32 %v1083, 0.0
        %v1135 = vmax.f32 %v1087, 0.0
        %v1136 = vmax.f32 %v1089, 0.0
        %v1137 = vmax.f32 %v1091, 0.0
        %v1138 = vmax.f32 %v1093, 0.0
        %v1139 = vmax.f32 %v1097, 0.0
        %v1140 = vmax.f32 %v1099, 0.0
        %v1141 = vmax.f32 %v1101, 0.0
        %v1142 = vmax.f32 %v1103, 0.0
        %v1143 = vmax.f32 %v1107, 0.0
        %v1144 = vmax.f32 %v1109, 0.0
        %v1145 = vmax.f32 %v1111, 0.0
        %v1146 = vmax.f32 %v1113, 0.0
        %v1147 = vmax.f32 %v1117, 0.0
        %v1148 = vmax.f32 %v1119, 0.0
        %v1149 = vpack.c.bf16 %v1125, %v1123
        %v1150 = vpack.c.bf16 %v1126, %v1124
        %v1151 = vpack.c.bf16 %v1129, %v1127
        %v1152 = vpack.c.bf16 %v1130, %v1128
        %v1153 = vpack.c.bf16 %v1133, %v1131
        %v1154 = vpack.c.bf16 %v1134, %v1132
        %v1155 = vpack.c.bf16 %v1137, %v1135
        %v1156 = vpack.c.bf16 %v1138, %v1136
        %v1157 = vpack.c.bf16 %v1141, %v1139
        %v1158 = vpack.c.bf16 %v1142, %v1140
        %v1159 = vpack.c.bf16 %v1145, %v1143
        %v1160 = vpack.c.bf16 %v1146, %v1144
        %v1161 = vpack.c.bf16 %v1147, %v1147
        %v1162 = vpack.c.bf16 %v1148, %v1148
        %v1195 = vunpack.c.l.b16 %v899
        %v1196 = vunpack.c.l.b16 %v900
        %v1197 = vunpack.c.l.b16 %v901
        %v1198 = vunpack.c.l.b16 %v902
        %v1199 = vunpack.c.l.b16 %v903
        %v1200 = vunpack.c.l.b16 %v904
        %v1201 = vunpack.c.l.b16 %v905
        %v1202 = vunpack.c.l.b16 %v906
        %v1203 = vunpack.c.l.b16 %v907
        %v1204 = vunpack.c.l.b16 %v908
        %v1205 = vunpack.c.l.b16 %v909
        %v1206 = vunpack.c.l.b16 %v910
        %v1207 = vunpack.c.l.b16 %v911
        %v1208 = vunpack.c.l.b16 %v912
        %v1209 = vunpack.c.l.b16 %v913
        %v1210 = vunpack.c.l.b16 %v914
        %v1211 = vunpack.c.l.b16 %v915
        %v1212 = vunpack.c.l.b16 %v916
        %v1213 = vunpack.c.l.b16 %v917
        %v1214 = vunpack.c.l.b16 %v918
        %v1215 = vunpack.c.l.b16 %v919
        %v1216 = vunpack.c.l.b16 %v920
        %v1217 = vunpack.c.l.b16 %v921
        %v1218 = vunpack.c.l.b16 %v922
        %v1219 = vunpack.c.l.b16 %v923
        %v1220 = vunpack.c.l.b16 %v924
        %v1221 = vunpack.c.l.b16 %v925
        %v1222 = vunpack.c.l.b16 %v926
        %v1223 = vunpack.c.l.b16 %v927
        %v1224 = vunpack.c.l.b16 %v928
        %v1225 = vunpack.c.l.b16 %v929
        %v1226 = vunpack.c.l.b16 %v930
        %v1227 = vpack.c.b16 %v1196, %v1195
        %v1228 = vpack.c.b16 %v1198, %v1197
        %v1229 = vpack.c.b16 %v1200, %v1199
        %v1230 = vpack.c.b16 %v1202, %v1201
        %v1231 = vpack.c.b16 %v1204, %v1203
        %v1232 = vpack.c.b16 %v1206, %v1205
        %v1233 = vpack.c.b16 %v1208, %v1207
        %v1234 = vpack.c.b16 %v1210, %v1209
        %v1235 = vpack.c.b16 %v1212, %v1211
        %v1236 = vpack.c.b16 %v1214, %v1213
        %v1237 = vpack.c.b16 %v1216, %v1215
        %v1238 = vpack.c.b16 %v1218, %v1217
        %v1239 = vpack.c.b16 %v1220, %v1219
        %v1240 = vpack.c.b16 %v1222, %v1221
        %v1241 = vpack.c.b16 %v1224, %v1223
        %v1242 = vpack.c.b16 %v1226, %v1225
        %1259 = vmatprep.subr.bf16.mxu0 0
        %1260 = vmatpush1.bf16.msra.mxu0 %v1227
        %1261 = vmatprep.subr.bf16.mxu0 0
        %1262 = vmatpush1.bf16.msra.mxu0 %v1228
        %1263 = vmatprep.subr.bf16.mxu0 0
        %1264 = vmatpush1.bf16.msra.mxu0 %v1229
        %1265 = vmatprep.subr.bf16.mxu0 0
        %1266 = vmatpush1.bf16.msra.mxu0 %v1230
        %1267 = vmatprep.subr.bf16.mxu0 0
        %1268 = vmatpush1.bf16.msra.mxu0 %v1231
        %1269 = vmatprep.subr.bf16.mxu0 0
        %1270 = vmatpush1.bf16.msra.mxu0 %v1232
        %1271 = vmatprep.subr.bf16.mxu0 0
        %1272 = vmatpush1.bf16.msra.mxu0 %v1233
        %1273 = vmatprep.subr.bf16.mxu0 0
        %1274 = vmatpush1.bf16.msra.mxu0 %v1234
        %1275 = vmatprep.subr.bf16.mxu0 0
        %1276 = vmatpush1.bf16.msra.mxu0 %v1235
        %1277 = vmatprep.subr.bf16.mxu0 0
        %1278 = vmatpush1.bf16.msra.mxu0 %v1236
        %1279 = vmatprep.subr.bf16.mxu0 0
        %1280 = vmatpush1.bf16.msra.mxu0 %v1237
        %1281 = vmatprep.subr.bf16.mxu0 0
        %1282 = vmatpush1.bf16.msra.mxu0 %v1238
        %1283 = vmatprep.subr.bf16.mxu0 0
        %1284 = vmatpush1.bf16.msra.mxu0 %v1239
        %1285 = vmatprep.subr.bf16.mxu0 0
        %1286 = vmatpush1.bf16.msra.mxu0 %v1240
        %1287 = vmatprep.subr.bf16.mxu0 0
        %1288 = vmatpush1.bf16.msra.mxu0 %v1241
        %1289 = vmatprep.subr.bf16.mxu0 0
        %1290 = vmatpush1.bf16.msra.mxu0 %v1242
        %1291 = vmatprep.mubr.bf16.mxu0 %v1150
        %1292 = vmatmul.mubr.bf16.gmra.mrb[0].mxu0 %v1149
        %v1293 = vpop.f32.mrb[0].mxu0
        %v1294 = vadd.f32 0.0, %v1293
        %v1295 = vpop.f32.mrb[0].mxu0
        %v1296 = vpop.f32.mrb[0].mxu0
        %v1297 = vadd.f32 0.0, %v1296
        %v1298 = vpop.f32.mrb[0].mxu0
        %1299 = vmatprep.mubr.bf16.mxu0 %v1152
        %1300 = vmatmul.mubr.bf16.gmra.mrb[0].mxu0 %v1151
        %v1301 = vpop.f32.mrb[0].mxu0
        %v1302 = vadd.f32 0.0, %v1301
        %v1303 = vpop.f32.mrb[0].mxu0
        %v1304 = vpop.f32.mrb[0].mxu0
        %v1305 = vadd.f32 0.0, %v1304
        %v1306 = vpop.f32.mrb[0].mxu0
        %1307 = vmatprep.mubr.bf16.mxu0 %v1154
        %1308 = vmatmul.mubr.bf16.gmra.mrb[0].mxu0 %v1153
        %v1309 = vpop.f32.mrb[0].mxu0
        %v1310 = vadd.f32 0.0, %v1309
        %v1311 = vpop.f32.mrb[0].mxu0
        %v1312 = vpop.f32.mrb[0].mxu0
        %v1313 = vadd.f32 0.0, %v1312
        %v1314 = vpop.f32.mrb[0].mxu0
        %1315 = vmatprep.mubr.bf16.mxu0 %v1156
        %1316 = vmatmul.mubr.bf16.gmra.mrb[0].mxu0 %v1155
        %v1317 = vpop.f32.mrb[0].mxu0
        %v1318 = vadd.f32 0.0, %v1317
        %v1319 = vpop.f32.mrb[0].mxu0
        %v1320 = vpop.f32.mrb[0].mxu0
        %v1321 = vadd.f32 0.0, %v1320
        %v1322 = vpop.f32.mrb[0].mxu0
        %1323 = vmatprep.mubr.bf16.mxu0 %v1158
        %1324 = vmatmul.mubr.bf16.gmra.mrb[0].mxu0 %v1157
        %v1325 = vpop.f32.mrb[0].mxu0
        %v1326 = vadd.f32 0.0, %v1325
        %v1327 = vpop.f32.mrb[0].mxu0
        %v1328 = vpop.f32.mrb[0].mxu0
        %v1329 = vadd.f32 0.0, %v1328
        %v1330 = vpop.f32.mrb[0].mxu0
        %1331 = vmatprep.mubr.bf16.mxu0 %v1160
        %1332 = vmatmul.mubr.bf16.gmra.mrb[0].mxu0 %v1159
        %v1333 = vpop.f32.mrb[0].mxu0
        %v1334 = vadd.f32 0.0, %v1333
        %v1335 = vpop.f32.mrb[0].mxu0
        %v1336 = vpop.f32.mrb[0].mxu0
        %v1337 = vadd.f32 0.0, %v1336
        %v1338 = vpop.f32.mrb[0].mxu0
        %1339 = vmatprep.mubr.bf16.mxu0 %v1162
        %1340 = vmatmul.mubr.bf16.gmra.mrb[0].mxu0 %v1161
        %v1341 = vpop.f32.mrb[0].mxu0
        %v1342 = vadd.f32 0.0, %v1341
        %v1343 = vpop.f32.mrb[0].mxu0
        %v1344 = vpop.f32.mrb[0].mxu0
        %v1345 = vpop.f32.mrb[0].mxu0
        %1346 = vdwg.mxu0
        %v1379 = vunpack.c.l.b16 %v615
        %v1380 = vunpack.c.l.b16 %v616
        %v1381 = vunpack.c.l.b16 %v617
        %v1382 = vunpack.c.l.b16 %v618
        %v1383 = vunpack.c.l.b16 %v619
        %v1384 = vunpack.c.l.b16 %v620
        %v1385 = vunpack.c.l.b16 %v621
        %v1386 = vunpack.c.l.b16 %v622
        %v1387 = vunpack.c.l.b16 %v623
        %v1388 = vunpack.c.l.b16 %v624
        %v1389 = vunpack.c.l.b16 %v625
        %v1390 = vunpack.c.l.b16 %v626
        %v1391 = vunpack.c.l.b16 %v627
        %v1392 = vunpack.c.l.b16 %v628
        %v1393 = vunpack.c.l.b16 %v629
        %v1394 = vunpack.c.l.b16 %v630
        %v1395 = vunpack.c.l.b16 %v631
        %v1396 = vunpack.c.l.b16 %v632
        %v1397 = vunpack.c.l.b16 %v633
        %v1398 = vunpack.c.l.b16 %v634
        %v1399 = vunpack.c.l.b16 %v635
        %v1400 = vunpack.c.l.b16 %v636
        %v1401 = vunpack.c.l.b16 %v637
        %v1402 = vunpack.c.l.b16 %v638
        %v1403 = vunpack.c.l.b16 %v639
        %v1404 = vunpack.c.l.b16 %v640
        %v1405 = vunpack.c.l.b16 %v641
        %v1406 = vunpack.c.l.b16 %v642
        %v1407 = vunpack.c.l.b16 %v643
        %v1408 = vunpack.c.l.b16 %v644
        %v1409 = vunpack.c.l.b16 %v645
        %v1410 = vunpack.c.l.b16 %v646
        %v1411 = vpack.c.b16 %v1380, %v1379
        %v1412 = vpack.c.b16 %v1382, %v1381
        %v1413 = vpack.c.b16 %v1384, %v1383
        %v1414 = vpack.c.b16 %v1386, %v1385
        %v1415 = vpack.c.b16 %v1388, %v1387
        %v1416 = vpack.c.b16 %v1390, %v1389
        %v1417 = vpack.c.b16 %v1392, %v1391
        %v1418 = vpack.c.b16 %v1394, %v1393
        %v1419 = vpack.c.b16 %v1396, %v1395
        %v1420 = vpack.c.b16 %v1398, %v1397
        %v1421 = vpack.c.b16 %v1400, %v1399
        %v1422 = vpack.c.b16 %v1402, %v1401
        %v1423 = vpack.c.b16 %v1404, %v1403
        %v1424 = vpack.c.b16 %v1406, %v1405
        %v1425 = vpack.c.b16 %v1408, %v1407
        %v1426 = vpack.c.b16 %v1410, %v1409
        %1443 = vmatprep.subr.bf16.mxu0 0
        %1444 = vmatpush1.bf16.msra.mxu0 %v1411
        %1445 = vmatprep.subr.bf16.mxu0 0
        %1446 = vmatpush1.bf16.msra.mxu0 %v1412
        %1447 = vmatprep.subr.bf16.mxu0 0
        %1448 = vmatpush1.bf16.msra.mxu0 %v1413
        %1449 = vmatprep.subr.bf16.mxu0 0
        %1450 = vmatpush1.bf16.msra.mxu0 %v1414
        %1451 = vmatprep.subr.bf16.mxu0 0
        %1452 = vmatpush1.bf16.msra.mxu0 %v1415
        %1453 = vmatprep.subr.bf16.mxu0 0
        %1454 = vmatpush1.bf16.msra.mxu0 %v1416
        %1455 = vmatprep.subr.bf16.mxu0 0
        %1456 = vmatpush1.bf16.msra.mxu0 %v1417
        %1457 = vmatprep.subr.bf16.mxu0 0
        %1458 = vmatpush1.bf16.msra.mxu0 %v1418
        %1459 = vmatprep.subr.bf16.mxu0 0
        %1460 = vmatpush1.bf16.msra.mxu0 %v1419
        %1461 = vmatprep.subr.bf16.mxu0 0
        %1462 = vmatpush1.bf16.msra.mxu0 %v1420
        %1463 = vmatprep.subr.bf16.mxu0 0
        %1464 = vmatpush1.bf16.msra.mxu0 %v1421
        %1465 = vmatprep.subr.bf16.mxu0 0
        %1466 = vmatpush1.bf16.msra.mxu0 %v1422
        %1467 = vmatprep.subr.bf16.mxu0 0
        %1468 = vmatpush1.bf16.msra.mxu0 %v1423
        %1469 = vmatprep.subr.bf16.mxu0 0
        %1470 = vmatpush1.bf16.msra.mxu0 %v1424
        %1471 = vmatprep.subr.bf16.mxu0 0
        %1472 = vmatpush1.bf16.msra.mxu0 %v1425
        %1473 = vmatprep.subr.bf16.mxu0 0
        %1474 = vmatpush1.bf16.msra.mxu0 %v1426
        %1475 = vmatprep.mubr.bf16.mxu0 %v866
        %1476 = vmatmul.mubr.bf16.gmra.mrb[0].mxu0 %v865
        %v1477 = vpop.f32.mrb[0].mxu0
        %v1478 = vadd.f32 %v1294, %v1477
        %v1479 = vpop.f32.mrb[0].mxu0
        %v1480 = vpop.f32.mrb[0].mxu0
        %v1481 = vadd.f32 %v1297, %v1480
        %v1482 = vpop.f32.mrb[0].mxu0
        %1483 = vmatprep.mubr.bf16.mxu0 %v868
        %1484 = vmatmul.mubr.bf16.gmra.mrb[0].mxu0 %v867
        %v1485 = vpop.f32.mrb[0].mxu0
        %v1486 = vadd.f32 %v1302, %v1485
        %v1487 = vpop.f32.mrb[0].mxu0
        %v1488 = vpop.f32.mrb[0].mxu0
        %v1489 = vadd.f32 %v1305, %v1488
        %v1490 = vpop.f32.mrb[0].mxu0
        %1491 = vmatprep.mubr.bf16.mxu0 %v870
        %1492 = vmatmul.mubr.bf16.gmra.mrb[0].mxu0 %v869
        %v1493 = vpop.f32.mrb[0].mxu0
        %v1494 = vadd.f32 %v1310, %v1493
        %v1495 = vpop.f32.mrb[0].mxu0
        %v1496 = vpop.f32.mrb[0].mxu0
        %v1497 = vadd.f32 %v1313, %v1496
        %v1498 = vpop.f32.mrb[0].mxu0
        %1499 = vmatprep.mubr.bf16.mxu0 %v872
        %1500 = vmatmul.mubr.bf16.gmra.mrb[0].mxu0 %v871
        %v1501 = vpop.f32.mrb[0].mxu0
        %v1502 = vadd.f32 %v1318, %v1501
        %v1503 = vpop.f32.mrb[0].mxu0
        %v1504 = vpop.f32.mrb[0].mxu0
        %v1505 = vadd.f32 %v1321, %v1504
        %v1506 = vpop.f32.mrb[0].mxu0
        %1507 = vmatprep.mubr.bf16.mxu0 %v874
        %1508 = vmatmul.mubr.bf16.gmra.mrb[0].mxu0 %v873
        %v1509 = vpop.f32.mrb[0].mxu0
        %v1510 = vadd.f32 %v1326, %v1509
        %v1511 = vpop.f32.mrb[0].mxu0
        %v1512 = vpop.f32.mrb[0].mxu0
        %v1513 = vadd.f32 %v1329, %v1512
        %v1514 = vpop.f32.mrb[0].mxu0
        %1515 = vmatprep.mubr.bf16.mxu0 %v876
        %1516 = vmatmul.mubr.bf16.gmra.mrb[0].mxu0 %v875
        %v1517 = vpop.f32.mrb[0].mxu0
        %v1518 = vadd.f32 %v1334, %v1517
        %v1519 = vpop.f32.mrb[0].mxu0
        %v1520 = vpop.f32.mrb[0].mxu0
        %v1521 = vadd.f32 %v1337, %v1520
        %v1522 = vpop.f32.mrb[0].mxu0
        %1523 = vmatprep.mubr.bf16.mxu0 %v878
        %1524 = vmatmul.mubr.bf16.gmra.mrb[0].mxu0 %v877
        %v1525 = vpop.f32.mrb[0].mxu0
        %v1526 = vadd.f32 %v1342, %v1525
        %v1527 = vpop.f32.mrb[0].mxu0
        %v1528 = vpop.f32.mrb[0].mxu0
        %v1529 = vpop.f32.mrb[0].mxu0
        %1530 = vdwg.mxu0
        %s1531 = scalar_lea.vmem %s3, 256
        %v1532 = vld [vmem:[%s1531] sm:$0xff]
        %v1533 = vld [vmem:[%s1531 + $0x8] sm:$0xff]
        %v1534 = vld [vmem:[%s1531 + $0x10] sm:$0xff]
        %v1535 = vld [vmem:[%s1531 + $0x18] sm:$0xff]
        %v1536 = vld [vmem:[%s1531 + $0x20] sm:$0xff]
        %v1537 = vld [vmem:[%s1531 + $0x28] sm:$0xff]
        %v1538 = vld [vmem:[%s1531 + $0x30] sm:$0xff]
        %v1539 = vld [vmem:[%s1531 + $0x38] sm:$0xff]
        %v1540 = vld [vmem:[%s1531 + $0x40] sm:$0xff]
        %v1541 = vld [vmem:[%s1531 + $0x48] sm:$0xff]
        %v1542 = vld [vmem:[%s1531 + $0x50] sm:$0xff]
        %v1543 = vld [vmem:[%s1531 + $0x58] sm:$0xff]
        %v1544 = vld [vmem:[%s1531 + $0x60] sm:$0xff]
        %v1545 = vld [vmem:[%s1531 + $0x68] sm:$0xff]
        %v1546 = vld [vmem:[%s1531 + $0x70] sm:$0xff]
        %v1547 = vld [vmem:[%s1531 + $0x78] sm:$0xff]
        %s1548 = scalar_lea.vmem %s4, 4
        %v1549 = vld [vmem:[%s1548] sm:$0x3]
        %s1550 = scalar_lea.vmem [#allocation2], 256
        %v1551 = vld [vmem:[%s1550] sm:$0xf]
        %v1552 = vld [vmem:[%s1550 + $0x4] sm:$0xf]
        %v1553 = vld [vmem:[%s1550 + $0x8] sm:$0xf]
        %v1554 = vld [vmem:[%s1550 + $0xc] sm:$0xf]
        %v1555 = vld [vmem:[%s1550 + $0x10] sm:$0xf]
        %v1556 = vld [vmem:[%s1550 + $0x14] sm:$0xf]
        %v1557 = vld [vmem:[%s1550 + $0x18] sm:$0xf]
        %v1558 = vld [vmem:[%s1550 + $0x1c] sm:$0xf]
        %v1559 = vld [vmem:[%s1550 + $0x20] sm:$0xf]
        %v1560 = vld [vmem:[%s1550 + $0x24] sm:$0xf]
        %v1561 = vld [vmem:[%s1550 + $0x28] sm:$0xf]
        %v1562 = vld [vmem:[%s1550 + $0x2c] sm:$0xf]
        %v1563 = vld [vmem:[%s1550 + $0x30] sm:$0xf]
        %v1564 = vld [vmem:[%s1550 + $0x34] sm:$0xf]
        %v1565 = vld [vmem:[%s1550 + $0x38] sm:$0xf]
        %v1566 = vld [vmem:[%s1550 + $0x3c] sm:$0xf]
        %v1567 = vld [vmem:[%s1550 + $0x40] sm:$0xf]
        %v1568 = vld [vmem:[%s1550 + $0x44] sm:$0xf]
        %v1569 = vld [vmem:[%s1550 + $0x48] sm:$0xf]
        %v1570 = vld [vmem:[%s1550 + $0x4c] sm:$0xf]
        %v1571 = vld [vmem:[%s1550 + $0x50] sm:$0xf]
        %v1572 = vld [vmem:[%s1550 + $0x54] sm:$0xf]
        %v1573 = vld [vmem:[%s1550 + $0x58] sm:$0xf]
        %v1574 = vld [vmem:[%s1550 + $0x5c] sm:$0xf]
        %v1575 = vld [vmem:[%s1550 + $0x60] sm:$0xf]
        %v1576 = vld [vmem:[%s1550 + $0x64] sm:$0xf]
        %v1577 = vld [vmem:[%s1550 + $0x68] sm:$0xf]
        %v1578 = vld [vmem:[%s1550 + $0x6c] sm:$0xf]
        %v1579 = vld [vmem:[%s1550 + $0x70] sm:$0xf]
        %v1580 = vld [vmem:[%s1550 + $0x74] sm:$0xf]
        %v1581 = vld [vmem:[%s1550 + $0x78] sm:$0xf]
        %v1582 = vld [vmem:[%s1550 + $0x7c] sm:$0xf]
        %v1584 = vlaneseq
        %v1585 = vshrl.u32 %v1584, 7
        %v1586 = vsub.s32 0, %v1585
        %v1587 = vrot.slane %v1549, %v1586
        %v1588 = vlaneseq
        %v1589 = vshrl.u32 %v1588, 7
        %v1590 = vsub.s32 1, %v1589
        %v1591 = vrot.slane %v1549, %v1590
        %v1610 = vunpack.c.l.b16 %v1532
        %v1611 = vunpack.c.h.b16 %v1532
        %v1612 = vunpack.c.l.b16 %v1533
        %v1613 = vunpack.c.h.b16 %v1533
        %v1614 = vunpack.c.l.b16 %v1534
        %v1615 = vunpack.c.h.b16 %v1534
        %v1616 = vunpack.c.l.b16 %v1535
        %v1617 = vunpack.c.h.b16 %v1535
        %v1618 = vunpack.c.l.b16 %v1536
        %v1619 = vunpack.c.h.b16 %v1536
        %v1620 = vunpack.c.l.b16 %v1537
        %v1621 = vunpack.c.h.b16 %v1537
        %v1622 = vunpack.c.l.b16 %v1538
        %v1623 = vunpack.c.h.b16 %v1538
        %v1624 = vunpack.c.l.b16 %v1539
        %v1625 = vunpack.c.h.b16 %v1539
        %v1626 = vunpack.c.l.b16 %v1540
        %v1627 = vunpack.c.h.b16 %v1540
        %v1628 = vunpack.c.l.b16 %v1541
        %v1629 = vunpack.c.h.b16 %v1541
        %v1630 = vunpack.c.l.b16 %v1542
        %v1631 = vunpack.c.h.b16 %v1542
        %v1632 = vunpack.c.l.b16 %v1543
        %v1633 = vunpack.c.h.b16 %v1543
        %v1634 = vunpack.c.l.b16 %v1544
        %v1635 = vunpack.c.h.b16 %v1544
        %v1636 = vunpack.c.l.b16 %v1545
        %v1637 = vunpack.c.h.b16 %v1545
        %v1638 = vunpack.c.l.b16 %v1546
        %v1639 = vunpack.c.h.b16 %v1546
        %v1640 = vunpack.c.l.b16 %v1547
        %v1641 = vunpack.c.h.b16 %v1547
        %v1642 = vpack.c.b16 %v1612, %v1610
        %v1643 = vpack.c.b16 %v1613, %v1611
        %v1644 = vpack.c.b16 %v1616, %v1614
        %v1645 = vpack.c.b16 %v1617, %v1615
        %v1646 = vpack.c.b16 %v1620, %v1618
        %v1647 = vpack.c.b16 %v1621, %v1619
        %v1648 = vpack.c.b16 %v1624, %v1622
        %v1649 = vpack.c.b16 %v1625, %v1623
        %v1650 = vpack.c.b16 %v1628, %v1626
        %v1651 = vpack.c.b16 %v1629, %v1627
        %v1652 = vpack.c.b16 %v1632, %v1630
        %v1653 = vpack.c.b16 %v1633, %v1631
        %v1654 = vpack.c.b16 %v1636, %v1634
        %v1655 = vpack.c.b16 %v1637, %v1635
        %v1656 = vpack.c.b16 %v1640, %v1638
        %v1657 = vpack.c.b16 %v1641, %v1639
        %1674 = vmatprep.subr.bf16.mxu0 %v1643
        %1675 = vmatpush1.bf16.msra.mxu0 %v1642
        %1676 = vmatprep.subr.bf16.mxu0 %v1645
        %1677 = vmatpush1.bf16.msra.mxu0 %v1644
        %1678 = vmatprep.subr.bf16.mxu0 %v1647
        %1679 = vmatpush1.bf16.msra.mxu0 %v1646
        %1680 = vmatprep.subr.bf16.mxu0 %v1649
        %1681 = vmatpush1.bf16.msra.mxu0 %v1648
        %1682 = vmatprep.subr.bf16.mxu0 %v1651
        %1683 = vmatpush1.bf16.msra.mxu0 %v1650
        %1684 = vmatprep.subr.bf16.mxu0 %v1653
        %1685 = vmatpush1.bf16.msra.mxu0 %v1652
        %1686 = vmatprep.subr.bf16.mxu0 %v1655
        %1687 = vmatpush1.bf16.msra.mxu0 %v1654
        %1688 = vmatprep.subr.bf16.mxu0 %v1657
        %1689 = vmatpush1.bf16.msra.mxu0 %v1656
        %1690 = vmatprep.subr.bf16.mxu0 0
        %1691 = vmatpush1.bf16.msra.mxu0 0
        %1692 = vmatprep.subr.bf16.mxu0 0
        %1693 = vmatpush1.bf16.msra.mxu0 0
        %1694 = vmatprep.subr.bf16.mxu0 0
        %1695 = vmatpush1.bf16.msra.mxu0 0
        %1696 = vmatprep.subr.bf16.mxu0 0
        %1697 = vmatpush1.bf16.msra.mxu0 0
        %1698 = vmatprep.subr.bf16.mxu0 0
        %1699 = vmatpush1.bf16.msra.mxu0 0
        %1700 = vmatprep.subr.bf16.mxu0 0
        %1701 = vmatpush1.bf16.msra.mxu0 0
        %1702 = vmatprep.subr.bf16.mxu0 0
        %1703 = vmatpush1.bf16.msra.mxu0 0
        %1704 = vmatprep.subr.bf16.mxu0 0
        %1705 = vmatpush1.bf16.msra.mxu0 0
        %1706 = vmatprep.mubr.bf16.mxu0 0
        %1707 = vmatmul.mubr.bf16.gmra.mrb[0].mxu0 %v591
        %v1708 = vpop.f32.mrb[0].mxu0
        %v1709 = vadd.f32 %v1587, %v1708
        %v1710 = vpop.f32.mrb[0].mxu0
        %v1711 = vadd.f32 %v1591, %v1710
        %v1712 = vpop.f32.mrb[0].mxu0
        %v1713 = vadd.f32 %v1587, %v1712
        %v1714 = vpop.f32.mrb[0].mxu0
        %v1715 = vadd.f32 %v1591, %v1714
        %1716 = vmatprep.mubr.bf16.mxu0 0
        %1717 = vmatmul.mubr.bf16.gmra.mrb[0].mxu0 %v592
        %v1718 = vpop.f32.mrb[0].mxu0
        %v1719 = vadd.f32 %v1587, %v1718
        %v1720 = vpop.f32.mrb[0].mxu0
        %v1721 = vadd.f32 %v1591, %v1720
        %v1722 = vpop.f32.mrb[0].mxu0
        %v1723 = vadd.f32 %v1587, %v1722
        %v1724 = vpop.f32.mrb[0].mxu0
        %v1725 = vadd.f32 %v1591, %v1724
        %1726 = vmatprep.mubr.bf16.mxu0 0
        %1727 = vmatmul.mubr.bf16.gmra.mrb[0].mxu0 %v593
        %v1728 = vpop.f32.mrb[0].mxu0
        %v1729 = vadd.f32 %v1587, %v1728
        %v1730 = vpop.f32.mrb[0].mxu0
        %v1731 = vadd.f32 %v1591, %v1730
        %v1732 = vpop.f32.mrb[0].mxu0
        %v1733 = vadd.f32 %v1587, %v1732
        %v1734 = vpop.f32.mrb[0].mxu0
        %v1735 = vadd.f32 %v1591, %v1734
        %1736 = vmatprep.mubr.bf16.mxu0 0
        %1737 = vmatmul.mubr.bf16.gmra.mrb[0].mxu0 %v594
        %v1738 = vpop.f32.mrb[0].mxu0
        %v1739 = vadd.f32 %v1587, %v1738
        %v1740 = vpop.f32.mrb[0].mxu0
        %v1741 = vadd.f32 %v1591, %v1740
        %v1742 = vpop.f32.mrb[0].mxu0
        %v1743 = vadd.f32 %v1587, %v1742
        %v1744 = vpop.f32.mrb[0].mxu0
        %v1745 = vadd.f32 %v1591, %v1744
        %1746 = vmatprep.mubr.bf16.mxu0 0
        %1747 = vmatmul.mubr.bf16.gmra.mrb[0].mxu0 %v595
        %v1748 = vpop.f32.mrb[0].mxu0
        %v1749 = vadd.f32 %v1587, %v1748
        %v1750 = vpop.f32.mrb[0].mxu0
        %v1751 = vadd.f32 %v1591, %v1750
        %v1752 = vpop.f32.mrb[0].mxu0
        %v1753 = vadd.f32 %v1587, %v1752
        %v1754 = vpop.f32.mrb[0].mxu0
        %v1755 = vadd.f32 %v1591, %v1754
        %1756 = vmatprep.mubr.bf16.mxu0 0
        %1757 = vmatmul.mubr.bf16.gmra.mrb[0].mxu0 %v596
        %v1758 = vpop.f32.mrb[0].mxu0
        %v1759 = vadd.f32 %v1587, %v1758
        %v1760 = vpop.f32.mrb[0].mxu0
        %v1761 = vadd.f32 %v1591, %v1760
        %v1762 = vpop.f32.mrb[0].mxu0
        %v1763 = vadd.f32 %v1587, %v1762
        %v1764 = vpop.f32.mrb[0].mxu0
        %v1765 = vadd.f32 %v1591, %v1764
        %1766 = vmatprep.mubr.bf16.mxu0 0
        %1767 = vmatmul.mubr.bf16.gmra.mrb[0].mxu0 %v597
        %v1768 = vpop.f32.mrb[0].mxu0
        %v1769 = vadd.f32 %v1587, %v1768
        %v1770 = vpop.f32.mrb[0].mxu0
        %v1771 = vadd.f32 %v1591, %v1770
        %v1772 = vpop.f32.mrb[0].mxu0
        %v1773 = vpop.f32.mrb[0].mxu0
        %1774 = vdwg.mxu0
        %v1775 = vmax.f32 %v1709, 0.0
        %v1776 = vmax.f32 %v1711, 0.0
        %v1777 = vmax.f32 %v1713, 0.0
        %v1778 = vmax.f32 %v1715, 0.0
        %v1779 = vmax.f32 %v1719, 0.0
        %v1780 = vmax.f32 %v1721, 0.0
        %v1781 = vmax.f32 %v1723, 0.0
        %v1782 = vmax.f32 %v1725, 0.0
        %v1783 = vmax.f32 %v1729, 0.0
        %v1784 = vmax.f32 %v1731, 0.0
        %v1785 = vmax.f32 %v1733, 0.0
        %v1786 = vmax.f32 %v1735, 0.0
        %v1787 = vmax.f32 %v1739, 0.0
        %v1788 = vmax.f32 %v1741, 0.0
        %v1789 = vmax.f32 %v1743, 0.0
        %v1790 = vmax.f32 %v1745, 0.0
        %v1791 = vmax.f32 %v1749, 0.0
        %v1792 = vmax.f32 %v1751, 0.0
        %v1793 = vmax.f32 %v1753, 0.0
        %v1794 = vmax.f32 %v1755, 0.0
        %v1795 = vmax.f32 %v1759, 0.0
        %v1796 = vmax.f32 %v1761, 0.0
        %v1797 = vmax.f32 %v1763, 0.0
        %v1798 = vmax.f32 %v1765, 0.0
        %v1799 = vmax.f32 %v1769, 0.0
        %v1800 = vmax.f32 %v1771, 0.0
        %v1801 = vpack.c.bf16 %v1777, %v1775
        %v1802 = vpack.c.bf16 %v1778, %v1776
        %v1803 = vpack.c.bf16 %v1781, %v1779
        %v1804 = vpack.c.bf16 %v1782, %v1780
        %v1805 = vpack.c.bf16 %v1785, %v1783
        %v1806 = vpack.c.bf16 %v1786, %v1784
        %v1807 = vpack.c.bf16 %v1789, %v1787
        %v1808 = vpack.c.bf16 %v1790, %v1788
        %v1809 = vpack.c.bf16 %v1793, %v1791
        %v1810 = vpack.c.bf16 %v1794, %v1792
        %v1811 = vpack.c.bf16 %v1797, %v1795
        %v1812 = vpack.c.bf16 %v1798, %v1796
        %v1813 = vpack.c.bf16 %v1799, %v1799
        %v1814 = vpack.c.bf16 %v1800, %v1800
        %v1847 = vunpack.c.l.b16 %v1551
        %v1848 = vunpack.c.l.b16 %v1552
        %v1849 = vunpack.c.l.b16 %v1553
        %v1850 = vunpack.c.l.b16 %v1554
        %v1851 = vunpack.c.l.b16 %v1555
        %v1852 = vunpack.c.l.b16 %v1556
        %v1853 = vunpack.c.l.b16 %v1557
        %v1854 = vunpack.c.l.b16 %v1558
        %v1855 = vunpack.c.l.b16 %v1559
        %v1856 = vunpack.c.l.b16 %v1560
        %v1857 = vunpack.c.l.b16 %v1561
        %v1858 = vunpack.c.l.b16 %v1562
        %v1859 = vunpack.c.l.b16 %v1563
        %v1860 = vunpack.c.l.b16 %v1564
        %v1861 = vunpack.c.l.b16 %v1565
        %v1862 = vunpack.c.l.b16 %v1566
        %v1863 = vunpack.c.l.b16 %v1567
        %v1864 = vunpack.c.l.b16 %v1568
        %v1865 = vunpack.c.l.b16 %v1569
        %v1866 = vunpack.c.l.b16 %v1570
        %v1867 = vunpack.c.l.b16 %v1571
        %v1868 = vunpack.c.l.b16 %v1572
        %v1869 = vunpack.c.l.b16 %v1573
        %v1870 = vunpack.c.l.b16 %v1574
        %v1871 = vunpack.c.l.b16 %v1575
        %v1872 = vunpack.c.l.b16 %v1576
        %v1873 = vunpack.c.l.b16 %v1577
        %v1874 = vunpack.c.l.b16 %v1578
        %v1875 = vunpack.c.l.b16 %v1579
        %v1876 = vunpack.c.l.b16 %v1580
        %v1877 = vunpack.c.l.b16 %v1581
        %v1878 = vunpack.c.l.b16 %v1582
        %v1879 = vpack.c.b16 %v1848, %v1847
        %v1880 = vpack.c.b16 %v1850, %v1849
        %v1881 = vpack.c.b16 %v1852, %v1851
        %v1882 = vpack.c.b16 %v1854, %v1853
        %v1883 = vpack.c.b16 %v1856, %v1855
        %v1884 = vpack.c.b16 %v1858, %v1857
        %v1885 = vpack.c.b16 %v1860, %v1859
        %v1886 = vpack.c.b16 %v1862, %v1861
        %v1887 = vpack.c.b16 %v1864, %v1863
        %v1888 = vpack.c.b16 %v1866, %v1865
        %v1889 = vpack.c.b16 %v1868, %v1867
        %v1890 = vpack.c.b16 %v1870, %v1869
        %v1891 = vpack.c.b16 %v1872, %v1871
        %v1892 = vpack.c.b16 %v1874, %v1873
        %v1893 = vpack.c.b16 %v1876, %v1875
        %v1894 = vpack.c.b16 %v1878, %v1877
        %1911 = vmatprep.subr.bf16.mxu0 0
        %1912 = vmatpush1.bf16.msra.mxu0 %v1879
        %1913 = vmatprep.subr.bf16.mxu0 0
        %1914 = vmatpush1.bf16.msra.mxu0 %v1880
        %1915 = vmatprep.subr.bf16.mxu0 0
        %1916 = vmatpush1.bf16.msra.mxu0 %v1881
        %1917 = vmatprep.subr.bf16.mxu0 0
        %1918 = vmatpush1.bf16.msra.mxu0 %v1882
        %1919 = vmatprep.subr.bf16.mxu0 0
        %1920 = vmatpush1.bf16.msra.mxu0 %v1883
        %1921 = vmatprep.subr.bf16.mxu0 0
        %1922 = vmatpush1.bf16.msra.mxu0 %v1884
        %1923 = vmatprep.subr.bf16.mxu0 0
        %1924 = vmatpush1.bf16.msra.mxu0 %v1885
        %1925 = vmatprep.subr.bf16.mxu0 0
        %1926 = vmatpush1.bf16.msra.mxu0 %v1886
        %1927 = vmatprep.subr.bf16.mxu0 0
        %1928 = vmatpush1.bf16.msra.mxu0 %v1887
        %1929 = vmatprep.subr.bf16.mxu0 0
        %1930 = vmatpush1.bf16.msra.mxu0 %v1888
        %1931 = vmatprep.subr.bf16.mxu0 0
        %1932 = vmatpush1.bf16.msra.mxu0 %v1889
        %1933 = vmatprep.subr.bf16.mxu0 0
        %1934 = vmatpush1.bf16.msra.mxu0 %v1890
        %1935 = vmatprep.subr.bf16.mxu0 0
        %1936 = vmatpush1.bf16.msra.mxu0 %v1891
        %1937 = vmatprep.subr.bf16.mxu0 0
        %1938 = vmatpush1.bf16.msra.mxu0 %v1892
        %1939 = vmatprep.subr.bf16.mxu0 0
        %1940 = vmatpush1.bf16.msra.mxu0 %v1893
        %1941 = vmatprep.subr.bf16.mxu0 0
        %1942 = vmatpush1.bf16.msra.mxu0 %v1894
        %1943 = vmatprep.mubr.bf16.mxu0 %v1802
        %1944 = vmatmul.mubr.bf16.gmra.mrb[0].mxu0 %v1801
        %v1945 = vpop.f32.mrb[0].mxu0
        %v1946 = vadd.f32 0.0, %v1945
        %v1947 = vpop.f32.mrb[0].mxu0
        %v1948 = vpop.f32.mrb[0].mxu0
        %v1949 = vadd.f32 0.0, %v1948
        %v1950 = vpop.f32.mrb[0].mxu0
        %1951 = vmatprep.mubr.bf16.mxu0 %v1804
        %1952 = vmatmul.mubr.bf16.gmra.mrb[0].mxu0 %v1803
        %v1953 = vpop.f32.mrb[0].mxu0
        %v1954 = vadd.f32 0.0, %v1953
        %v1955 = vpop.f32.mrb[0].mxu0
        %v1956 = vpop.f32.mrb[0].mxu0
        %v1957 = vadd.f32 0.0, %v1956
        %v1958 = vpop.f32.mrb[0].mxu0
        %1959 = vmatprep.mubr.bf16.mxu0 %v1806
        %1960 = vmatmul.mubr.bf16.gmra.mrb[0].mxu0 %v1805
        %v1961 = vpop.f32.mrb[0].mxu0
        %v1962 = vadd.f32 0.0, %v1961
        %v1963 = vpop.f32.mrb[0].mxu0
        %v1964 = vpop.f32.mrb[0].mxu0
        %v1965 = vadd.f32 0.0, %v1964
        %v1966 = vpop.f32.mrb[0].mxu0
        %1967 = vmatprep.mubr.bf16.mxu0 %v1808
        %1968 = vmatmul.mubr.bf16.gmra.mrb[0].mxu0 %v1807
        %v1969 = vpop.f32.mrb[0].mxu0
        %v1970 = vadd.f32 0.0, %v1969
        %v1971 = vpop.f32.mrb[0].mxu0
        %v1972 = vpop.f32.mrb[0].mxu0
        %v1973 = vadd.f32 0.0, %v1972
        %v1974 = vpop.f32.mrb[0].mxu0
        %1975 = vmatprep.mubr.bf16.mxu0 %v1810
        %1976 = vmatmul.mubr.bf16.gmra.mrb[0].mxu0 %v1809
        %v1977 = vpop.f32.mrb[0].mxu0
        %v1978 = vadd.f32 0.0, %v1977
        %v1979 = vpop.f32.mrb[0].mxu0
        %v1980 = vpop.f32.mrb[0].mxu0
        %v1981 = vadd.f32 0.0, %v1980
        %v1982 = vpop.f32.mrb[0].mxu0
        %1983 = vmatprep.mubr.bf16.mxu0 %v1812
        %1984 = vmatmul.mubr.bf16.gmra.mrb[0].mxu0 %v1811
        %v1985 = vpop.f32.mrb[0].mxu0
        %v1986 = vadd.f32 0.0, %v1985
        %v1987 = vpop.f32.mrb[0].mxu0
        %v1988 = vpop.f32.mrb[0].mxu0
        %v1989 = vadd.f32 0.0, %v1988
        %v1990 = vpop.f32.mrb[0].mxu0
        %1991 = vmatprep.mubr.bf16.mxu0 %v1814
        %1992 = vmatmul.mubr.bf16.gmra.mrb[0].mxu0 %v1813
        %v1993 = vpop.f32.mrb[0].mxu0
        %v1994 = vadd.f32 0.0, %v1993
        %v1995 = vpop.f32.mrb[0].mxu0
        %v1996 = vpop.f32.mrb[0].mxu0
        %v1997 = vpop.f32.mrb[0].mxu0
        %1998 = vdwg.mxu0
        %v1999 = vadd.f32 %v1478, %v1946
        %v2000 = vadd.f32 %v1481, %v1949
        %v2001 = vadd.f32 %v1486, %v1954
        %v2002 = vadd.f32 %v1489, %v1957
        %v2003 = vadd.f32 %v1494, %v1962
        %v2004 = vadd.f32 %v1497, %v1965
        %v2005 = vadd.f32 %v1502, %v1970
        %v2006 = vadd.f32 %v1505, %v1973
        %v2007 = vadd.f32 %v1510, %v1978
        %v2008 = vadd.f32 %v1513, %v1981
        %v2009 = vadd.f32 %v1518, %v1986
        %v2010 = vadd.f32 %v1521, %v1989
        %v2011 = vadd.f32 %v1526, %v1994
        %s2012 = scalar_lea.vmem %s3, 384
        %v2013 = vld [vmem:[%s2012] sm:$0xff]
        %v2014 = vld [vmem:[%s2012 + $0x8] sm:$0xff]
        %v2015 = vld [vmem:[%s2012 + $0x10] sm:$0xff]
        %v2016 = vld [vmem:[%s2012 + $0x18] sm:$0xff]
        %v2017 = vld [vmem:[%s2012 + $0x20] sm:$0xff]
        %v2018 = vld [vmem:[%s2012 + $0x28] sm:$0xff]
        %v2019 = vld [vmem:[%s2012 + $0x30] sm:$0xff]
        %v2020 = vld [vmem:[%s2012 + $0x38] sm:$0xff]
        %v2021 = vld [vmem:[%s2012 + $0x40] sm:$0xff]
        %v2022 = vld [vmem:[%s2012 + $0x48] sm:$0xff]
        %v2023 = vld [vmem:[%s2012 + $0x50] sm:$0xff]
        %v2024 = vld [vmem:[%s2012 + $0x58] sm:$0xff]
        %v2025 = vld [vmem:[%s2012 + $0x60] sm:$0xff]
        %v2026 = vld [vmem:[%s2012 + $0x68] sm:$0xff]
        %v2027 = vld [vmem:[%s2012 + $0x70] sm:$0xff]
        %v2028 = vld [vmem:[%s2012 + $0x78] sm:$0xff]
        %s2029 = scalar_lea.vmem %s4, 6
        %v2030 = vld [vmem:[%s2029] sm:$0x3]
        %s2031 = scalar_lea.vmem [#allocation2], 384
        %v2032 = vld [vmem:[%s2031] sm:$0xf]
        %v2033 = vld [vmem:[%s2031 + $0x4] sm:$0xf]
        %v2034 = vld [vmem:[%s2031 + $0x8] sm:$0xf]
        %v2035 = vld [vmem:[%s2031 + $0xc] sm:$0xf]
        %v2036 = vld [vmem:[%s2031 + $0x10] sm:$0xf]
        %v2037 = vld [vmem:[%s2031 + $0x14] sm:$0xf]
        %v2038 = vld [vmem:[%s2031 + $0x18] sm:$0xf]
        %v2039 = vld [vmem:[%s2031 + $0x1c] sm:$0xf]
        %v2040 = vld [vmem:[%s2031 + $0x20] sm:$0xf]
        %v2041 = vld [vmem:[%s2031 + $0x24] sm:$0xf]
        %v2042 = vld [vmem:[%s2031 + $0x28] sm:$0xf]
        %v2043 = vld [vmem:[%s2031 + $0x2c] sm:$0xf]
        %v2044 = vld [vmem:[%s2031 + $0x30] sm:$0xf]
        %v2045 = vld [vmem:[%s2031 + $0x34] sm:$0xf]
        %v2046 = vld [vmem:[%s2031 + $0x38] sm:$0xf]
        %v2047 = vld [vmem:[%s2031 + $0x3c] sm:$0xf]
        %v2048 = vld [vmem:[%s2031 + $0x40] sm:$0xf]
        %v2049 = vld [vmem:[%s2031 + $0x44] sm:$0xf]
        %v2050 = vld [vmem:[%s2031 + $0x48] sm:$0xf]
        %v2051 = vld [vmem:[%s2031 + $0x4c] sm:$0xf]
        %v2052 = vld [vmem:[%s2031 + $0x50] sm:$0xf]
        %v2053 = vld [vmem:[%s2031 + $0x54] sm:$0xf]
        %v2054 = vld [vmem:[%s2031 + $0x58] sm:$0xf]
        %v2055 = vld [vmem:[%s2031 + $0x5c] sm:$0xf]
        %v2056 = vld [vmem:[%s2031 + $0x60] sm:$0xf]
        %v2057 = vld [vmem:[%s2031 + $0x64] sm:$0xf]
        %v2058 = vld [vmem:[%s2031 + $0x68] sm:$0xf]
        %v2059 = vld [vmem:[%s2031 + $0x6c] sm:$0xf]
        %v2060 = vld [vmem:[%s2031 + $0x70] sm:$0xf]
        %v2061 = vld [vmem:[%s2031 + $0x74] sm:$0xf]
        %v2062 = vld [vmem:[%s2031 + $0x78] sm:$0xf]
        %v2063 = vld [vmem:[%s2031 + $0x7c] sm:$0xf]
        %v2065 = vlaneseq
        %v2066 = vshrl.u32 %v2065, 7
        %v2067 = vsub.s32 0, %v2066
        %v2068 = vrot.slane %v2030, %v2067
        %v2069 = vlaneseq
        %v2070 = vshrl.u32 %v2069, 7
        %v2071 = vsub.s32 1, %v2070
        %v2072 = vrot.slane %v2030, %v2071
        %v2091 = vunpack.c.l.b16 %v2013
        %v2092 = vunpack.c.h.b16 %v2013
        %v2093 = vunpack.c.l.b16 %v2014
        %v2094 = vunpack.c.h.b16 %v2014
        %v2095 = vunpack.c.l.b16 %v2015
        %v2096 = vunpack.c.h.b16 %v2015
        %v2097 = vunpack.c.l.b16 %v2016
        %v2098 = vunpack.c.h.b16 %v2016
        %v2099 = vunpack.c.l.b16 %v2017
        %v2100 = vunpack.c.h.b16 %v2017
        %v2101 = vunpack.c.l.b16 %v2018
        %v2102 = vunpack.c.h.b16 %v2018
        %v2103 = vunpack.c.l.b16 %v2019
        %v2104 = vunpack.c.h.b16 %v2019
        %v2105 = vunpack.c.l.b16 %v2020
        %v2106 = vunpack.c.h.b16 %v2020
        %v2107 = vunpack.c.l.b16 %v2021
        %v2108 = vunpack.c.h.b16 %v2021
        %v2109 = vunpack.c.l.b16 %v2022
        %v2110 = vunpack.c.h.b16 %v2022
        %v2111 = vunpack.c.l.b16 %v2023
        %v2112 = vunpack.c.h.b16 %v2023
        %v2113 = vunpack.c.l.b16 %v2024
        %v2114 = vunpack.c.h.b16 %v2024
        %v2115 = vunpack.c.l.b16 %v2025
        %v2116 = vunpack.c.h.b16 %v2025
        %v2117 = vunpack.c.l.b16 %v2026
        %v2118 = vunpack.c.h.b16 %v2026
        %v2119 = vunpack.c.l.b16 %v2027
        %v2120 = vunpack.c.h.b16 %v2027
        %v2121 = vunpack.c.l.b16 %v2028
        %v2122 = vunpack.c.h.b16 %v2028
        %v2123 = vpack.c.b16 %v2093, %v2091
        %v2124 = vpack.c.b16 %v2094, %v2092
        %v2125 = vpack.c.b16 %v2097, %v2095
        %v2126 = vpack.c.b16 %v2098, %v2096
        %v2127 = vpack.c.b16 %v2101, %v2099
        %v2128 = vpack.c.b16 %v2102, %v2100
        %v2129 = vpack.c.b16 %v2105, %v2103
        %v2130 = vpack.c.b16 %v2106, %v2104
        %v2131 = vpack.c.b16 %v2109, %v2107
        %v2132 = vpack.c.b16 %v2110, %v2108
        %v2133 = vpack.c.b16 %v2113, %v2111
        %v2134 = vpack.c.b16 %v2114, %v2112
        %v2135 = vpack.c.b16 %v2117, %v2115
        %v2136 = vpack.c.b16 %v2118, %v2116
        %v2137 = vpack.c.b16 %v2121, %v2119
        %v2138 = vpack.c.b16 %v2122, %v2120
        %2155 = vmatprep.subr.bf16.mxu0 %v2124
        %2156 = vmatpush1.bf16.msra.mxu0 %v2123
        %2157 = vmatprep.subr.bf16.mxu0 %v2126
        %2158 = vmatpush1.bf16.msra.mxu0 %v2125
        %2159 = vmatprep.subr.bf16.mxu0 %v2128
        %2160 = vmatpush1.bf16.msra.mxu0 %v2127
        %2161 = vmatprep.subr.bf16.mxu0 %v2130
        %2162 = vmatpush1.bf16.msra.mxu0 %v2129
        %2163 = vmatprep.subr.bf16.mxu0 %v2132
        %2164 = vmatpush1.bf16.msra.mxu0 %v2131
        %2165 = vmatprep.subr.bf16.mxu0 %v2134
        %2166 = vmatpush1.bf16.msra.mxu0 %v2133
        %2167 = vmatprep.subr.bf16.mxu0 %v2136
        %2168 = vmatpush1.bf16.msra.mxu0 %v2135
        %2169 = vmatprep.subr.bf16.mxu0 %v2138
        %2170 = vmatpush1.bf16.msra.mxu0 %v2137
        %2171 = vmatprep.subr.bf16.mxu0 0
        %2172 = vmatpush1.bf16.msra.mxu0 0
        %2173 = vmatprep.subr.bf16.mxu0 0
        %2174 = vmatpush1.bf16.msra.mxu0 0
        %2175 = vmatprep.subr.bf16.mxu0 0
        %2176 = vmatpush1.bf16.msra.mxu0 0
        %2177 = vmatprep.subr.bf16.mxu0 0
        %2178 = vmatpush1.bf16.msra.mxu0 0
        %2179 = vmatprep.subr.bf16.mxu0 0
        %2180 = vmatpush1.bf16.msra.mxu0 0
        %2181 = vmatprep.subr.bf16.mxu0 0
        %2182 = vmatpush1.bf16.msra.mxu0 0
        %2183 = vmatprep.subr.bf16.mxu0 0
        %2184 = vmatpush1.bf16.msra.mxu0 0
        %2185 = vmatprep.subr.bf16.mxu0 0
        %2186 = vmatpush1.bf16.msra.mxu0 0
        %2187 = vmatprep.mubr.bf16.mxu0 0
        %2188 = vmatmul.mubr.bf16.gmra.mrb[0].mxu0 %v591
        %v2189 = vpop.f32.mrb[0].mxu0
        %v2190 = vadd.f32 %v2068, %v2189
        %v2191 = vpop.f32.mrb[0].mxu0
        %v2192 = vadd.f32 %v2072, %v2191
        %v2193 = vpop.f32.mrb[0].mxu0
        %v2194 = vadd.f32 %v2068, %v2193
        %v2195 = vpop.f32.mrb[0].mxu0
        %v2196 = vadd.f32 %v2072, %v2195
        %2197 = vmatprep.mubr.bf16.mxu0 0
        %2198 = vmatmul.mubr.bf16.gmra.mrb[0].mxu0 %v592
        %v2199 = vpop.f32.mrb[0].mxu0
        %v2200 = vadd.f32 %v2068, %v2199
        %v2201 = vpop.f32.mrb[0].mxu0
        %v2202 = vadd.f32 %v2072, %v2201
        %v2203 = vpop.f32.mrb[0].mxu0
        %v2204 = vadd.f32 %v2068, %v2203
        %v2205 = vpop.f32.mrb[0].mxu0
        %v2206 = vadd.f32 %v2072, %v2205
        %2207 = vmatprep.mubr.bf16.mxu0 0
        %2208 = vmatmul.mubr.bf16.gmra.mrb[0].mxu0 %v593
        %v2209 = vpop.f32.mrb[0].mxu0
        %v2210 = vadd.f32 %v2068, %v2209
        %v2211 = vpop.f32.mrb[0].mxu0
        %v2212 = vadd.f32 %v2072, %v2211
        %v2213 = vpop.f32.mrb[0].mxu0
        %v2214 = vadd.f32 %v2068, %v2213
        %v2215 = vpop.f32.mrb[0].mxu0
        %v2216 = vadd.f32 %v2072, %v2215
        %2217 = vmatprep.mubr.bf16.mxu0 0
        %2218 = vmatmul.mubr.bf16.gmra.mrb[0].mxu0 %v594
        %v2219 = vpop.f32.mrb[0].mxu0
        %v2220 = vadd.f32 %v2068, %v2219
        %v2221 = vpop.f32.mrb[0].mxu0
        %v2222 = vadd.f32 %v2072, %v2221
        %v2223 = vpop.f32.mrb[0].mxu0
        %v2224 = vadd.f32 %v2068, %v2223
        %v2225 = vpop.f32.mrb[0].mxu0
        %v2226 = vadd.f32 %v2072, %v2225
        %2227 = vmatprep.mubr.bf16.mxu0 0
        %2228 = vmatmul.mubr.bf16.gmra.mrb[0].mxu0 %v595
        %v2229 = vpop.f32.mrb[0].mxu0
        %v2230 = vadd.f32 %v2068, %v2229
        %v2231 = vpop.f32.mrb[0].mxu0
        %v2232 = vadd.f32 %v2072, %v2231
        %v2233 = vpop.f32.mrb[0].mxu0
        %v2234 = vadd.f32 %v2068, %v2233
        %v2235 = vpop.f32.mrb[0].mxu0
        %v2236 = vadd.f32 %v2072, %v2235
        %2237 = vmatprep.mubr.bf16.mxu0 0
        %2238 = vmatmul.mubr.bf16.gmra.mrb[0].mxu0 %v596
        %v2239 = vpop.f32.mrb[0].mxu0
        %v2240 = vadd.f32 %v2068, %v2239
        %v2241 = vpop.f32.mrb[0].mxu0
        %v2242 = vadd.f32 %v2072, %v2241
        %v2243 = vpop.f32.mrb[0].mxu0
        %v2244 = vadd.f32 %v2068, %v2243
        %v2245 = vpop.f32.mrb[0].mxu0
        %v2246 = vadd.f32 %v2072, %v2245
        %2247 = vmatprep.mubr.bf16.mxu0 0
        %2248 = vmatmul.mubr.bf16.gmra.mrb[0].mxu0 %v597
        %v2249 = vpop.f32.mrb[0].mxu0
        %v2250 = vadd.f32 %v2068, %v2249
        %v2251 = vpop.f32.mrb[0].mxu0
        %v2252 = vadd.f32 %v2072, %v2251
        %v2253 = vpop.f32.mrb[0].mxu0
        %v2254 = vpop.f32.mrb[0].mxu0
        %2255 = vdwg.mxu0
        %v2256 = vmax.f32 %v2190, 0.0
        %v2257 = vmax.f32 %v2192, 0.0
        %v2258 = vmax.f32 %v2194, 0.0
        %v2259 = vmax.f32 %v2196, 0.0
        %v2260 = vmax.f32 %v2200, 0.0
        %v2261 = vmax.f32 %v2202, 0.0
        %v2262 = vmax.f32 %v2204, 0.0
        %v2263 = vmax.f32 %v2206, 0.0
        %v2264 = vmax.f32 %v2210, 0.0
        %v2265 = vmax.f32 %v2212, 0.0
        %v2266 = vmax.f32 %v2214, 0.0
        %v2267 = vmax.f32 %v2216, 0.0
        %v2268 = vmax.f32 %v2220, 0.0
        %v2269 = vmax.f32 %v2222, 0.0
        %v2270 = vmax.f32 %v2224, 0.0
        %v2271 = vmax.f32 %v2226, 0.0
        %v2272 = vmax.f32 %v2230, 0.0
        %v2273 = vmax.f32 %v2232, 0.0
        %v2274 = vmax.f32 %v2234, 0.0
        %v2275 = vmax.f32 %v2236, 0.0
        %v2276 = vmax.f32 %v2240, 0.0
        %v2277 = vmax.f32 %v2242, 0.0
        %v2278 = vmax.f32 %v2244, 0.0
        %v2279 = vmax.f32 %v2246, 0.0
        %v2280 = vmax.f32 %v2250, 0.0
        %v2281 = vmax.f32 %v2252, 0.0
        %v2282 = vpack.c.bf16 %v2258, %v2256
        %v2283 = vpack.c.bf16 %v2259, %v2257
        %v2284 = vpack.c.bf16 %v2262, %v2260
        %v2285 = vpack.c.bf16 %v2263, %v2261
        %v2286 = vpack.c.bf16 %v2266, %v2264
        %v2287 = vpack.c.bf16 %v2267, %v2265
        %v2288 = vpack.c.bf16 %v2270, %v2268
        %v2289 = vpack.c.bf16 %v2271, %v2269
        %v2290 = vpack.c.bf16 %v2274, %v2272
        %v2291 = vpack.c.bf16 %v2275, %v2273
        %v2292 = vpack.c.bf16 %v2278, %v2276
        %v2293 = vpack.c.bf16 %v2279, %v2277
        %v2294 = vpack.c.bf16 %v2280, %v2280
        %v2295 = vpack.c.bf16 %v2281, %v2281
        %v2328 = vunpack.c.l.b16 %v2032
        %v2329 = vunpack.c.l.b16 %v2033
        %v2330 = vunpack.c.l.b16 %v2034
        %v2331 = vunpack.c.l.b16 %v2035
        %v2332 = vunpack.c.l.b16 %v2036
        %v2333 = vunpack.c.l.b16 %v2037
        %v2334 = vunpack.c.l.b16 %v2038
        %v2335 = vunpack.c.l.b16 %v2039
        %v2336 = vunpack.c.l.b16 %v2040
        %v2337 = vunpack.c.l.b16 %v2041
        %v2338 = vunpack.c.l.b16 %v2042
        %v2339 = vunpack.c.l.b16 %v2043
        %v2340 = vunpack.c.l.b16 %v2044
        %v2341 = vunpack.c.l.b16 %v2045
        %v2342 = vunpack.c.l.b16 %v2046
        %v2343 = vunpack.c.l.b16 %v2047
        %v2344 = vunpack.c.l.b16 %v2048
        %v2345 = vunpack.c.l.b16 %v2049
        %v2346 = vunpack.c.l.b16 %v2050
        %v2347 = vunpack.c.l.b16 %v2051
        %v2348 = vunpack.c.l.b16 %v2052
        %v2349 = vunpack.c.l.b16 %v2053
        %v2350 = vunpack.c.l.b16 %v2054
        %v2351 = vunpack.c.l.b16 %v2055
        %v2352 = vunpack.c.l.b16 %v2056
        %v2353 = vunpack.c.l.b16 %v2057
        %v2354 = vunpack.c.l.b16 %v2058
        %v2355 = vunpack.c.l.b16 %v2059
        %v2356 = vunpack.c.l.b16 %v2060
        %v2357 = vunpack.c.l.b16 %v2061
        %v2358 = vunpack.c.l.b16 %v2062
        %v2359 = vunpack.c.l.b16 %v2063
        %v2360 = vpack.c.b16 %v2329, %v2328
        %v2361 = vpack.c.b16 %v2331, %v2330
        %v2362 = vpack.c.b16 %v2333, %v2332
        %v2363 = vpack.c.b16 %v2335, %v2334
        %v2364 = vpack.c.b16 %v2337, %v2336
        %v2365 = vpack.c.b16 %v2339, %v2338
        %v2366 = vpack.c.b16 %v2341, %v2340
        %v2367 = vpack.c.b16 %v2343, %v2342
        %v2368 = vpack.c.b16 %v2345, %v2344
        %v2369 = vpack.c.b16 %v2347, %v2346
        %v2370 = vpack.c.b16 %v2349, %v2348
        %v2371 = vpack.c.b16 %v2351, %v2350
        %v2372 = vpack.c.b16 %v2353, %v2352
        %v2373 = vpack.c.b16 %v2355, %v2354
        %v2374 = vpack.c.b16 %v2357, %v2356
        %v2375 = vpack.c.b16 %v2359, %v2358
        %2392 = vmatprep.subr.bf16.mxu0 0
        %2393 = vmatpush1.bf16.msra.mxu0 %v2360
        %2394 = vmatprep.subr.bf16.mxu0 0
        %2395 = vmatpush1.bf16.msra.mxu0 %v2361
        %2396 = vmatprep.subr.bf16.mxu0 0
        %2397 = vmatpush1.bf16.msra.mxu0 %v2362
        %2398 = vmatprep.subr.bf16.mxu0 0
        %2399 = vmatpush1.bf16.msra.mxu0 %v2363
        %2400 = vmatprep.subr.bf16.mxu0 0
        %2401 = vmatpush1.bf16.msra.mxu0 %v2364
        %2402 = vmatprep.subr.bf16.mxu0 0
        %2403 = vmatpush1.bf16.msra.mxu0 %v2365
        %2404 = vmatprep.subr.bf16.mxu0 0
        %2405 = vmatpush1.bf16.msra.mxu0 %v2366
        %2406 = vmatprep.subr.bf16.mxu0 0
        %2407 = vmatpush1.bf16.msra.mxu0 %v2367
        %2408 = vmatprep.subr.bf16.mxu0 0
        %2409 = vmatpush1.bf16.msra.mxu0 %v2368
        %2410 = vmatprep.subr.bf16.mxu0 0
        %2411 = vmatpush1.bf16.msra.mxu0 %v2369
        %2412 = vmatprep.subr.bf16.mxu0 0
        %2413 = vmatpush1.bf16.msra.mxu0 %v2370
        %2414 = vmatprep.subr.bf16.mxu0 0
        %2415 = vmatpush1.bf16.msra.mxu0 %v2371
        %2416 = vmatprep.subr.bf16.mxu0 0
        %2417 = vmatpush1.bf16.msra.mxu0 %v2372
        %2418 = vmatprep.subr.bf16.mxu0 0
        %2419 = vmatpush1.bf16.msra.mxu0 %v2373
        %2420 = vmatprep.subr.bf16.mxu0 0
        %2421 = vmatpush1.bf16.msra.mxu0 %v2374
        %2422 = vmatprep.subr.bf16.mxu0 0
        %2423 = vmatpush1.bf16.msra.mxu0 %v2375
        %2424 = vmatprep.mubr.bf16.mxu0 %v2283
        %2425 = vmatmul.mubr.bf16.gmra.mrb[0].mxu0 %v2282
        %v2426 = vpop.f32.mrb[0].mxu0
        %v2427 = vadd.f32 0.0, %v2426
        %v2428 = vpop.f32.mrb[0].mxu0
        %v2429 = vpop.f32.mrb[0].mxu0
        %v2430 = vadd.f32 0.0, %v2429
        %v2431 = vpop.f32.mrb[0].mxu0
        %2432 = vmatprep.mubr.bf16.mxu0 %v2285
        %2433 = vmatmul.mubr.bf16.gmra.mrb[0].mxu0 %v2284
        %v2434 = vpop.f32.mrb[0].mxu0
        %v2435 = vadd.f32 0.0, %v2434
        %v2436 = vpop.f32.mrb[0].mxu0
        %v2437 = vpop.f32.mrb[0].mxu0
        %v2438 = vadd.f32 0.0, %v2437
        %v2439 = vpop.f32.mrb[0].mxu0
        %2440 = vmatprep.mubr.bf16.mxu0 %v2287
        %2441 = vmatmul.mubr.bf16.gmra.mrb[0].mxu0 %v2286
        %v2442 = vpop.f32.mrb[0].mxu0
        %v2443 = vadd.f32 0.0, %v2442
        %v2444 = vpop.f32.mrb[0].mxu0
        %v2445 = vpop.f32.mrb[0].mxu0
        %v2446 = vadd.f32 0.0, %v2445
        %v2447 = vpop.f32.mrb[0].mxu0
        %2448 = vmatprep.mubr.bf16.mxu0 %v2289
        %2449 = vmatmul.mubr.bf16.gmra.mrb[0].mxu0 %v2288
        %v2450 = vpop.f32.mrb[0].mxu0
        %v2451 = vadd.f32 0.0, %v2450
        %v2452 = vpop.f32.mrb[0].mxu0
        %v2453 = vpop.f32.mrb[0].mxu0
        %v2454 = vadd.f32 0.0, %v2453
        %v2455 = vpop.f32.mrb[0].mxu0
        %2456 = vmatprep.mubr.bf16.mxu0 %v2291
        %2457 = vmatmul.mubr.bf16.gmra.mrb[0].mxu0 %v2290
        %v2458 = vpop.f32.mrb[0].mxu0
        %v2459 = vadd.f32 0.0, %v2458
        %v2460 = vpop.f32.mrb[0].mxu0
        %v2461 = vpop.f32.mrb[0].mxu0
        %v2462 = vadd.f32 0.0, %v2461
        %v2463 = vpop.f32.mrb[0].mxu0
        %2464 = vmatprep.mubr.bf16.mxu0 %v2293
        %2465 = vmatmul.mubr.bf16.gmra.mrb[0].mxu0 %v2292
        %v2466 = vpop.f32.mrb[0].mxu0
        %v2467 = vadd.f32 0.0, %v2466
        %v2468 = vpop.f32.mrb[0].mxu0
        %v2469 = vpop.f32.mrb[0].mxu0
        %v2470 = vadd.f32 0.0, %v2469
        %v2471 = vpop.f32.mrb[0].mxu0
        %2472 = vmatprep.mubr.bf16.mxu0 %v2295
        %2473 = vmatmul.mubr.bf16.gmra.mrb[0].mxu0 %v2294
        %v2474 = vpop.f32.mrb[0].mxu0
        %v2475 = vadd.f32 0.0, %v2474
        %v2476 = vpop.f32.mrb[0].mxu0
        %v2477 = vpop.f32.mrb[0].mxu0
        %v2478 = vpop.f32.mrb[0].mxu0
        %2479 = vdwg.mxu0
        %v2480 = vadd.f32 %v1999, %v2427
        %v2481 = vadd.f32 %v2000, %v2430
        %v2482 = vadd.f32 %v2001, %v2435
        %v2483 = vadd.f32 %v2002, %v2438
        %v2484 = vadd.f32 %v2003, %v2443
        %v2485 = vadd.f32 %v2004, %v2446
        %v2486 = vadd.f32 %v2005, %v2451
        %v2487 = vadd.f32 %v2006, %v2454
        %v2488 = vadd.f32 %v2007, %v2459
        %v2489 = vadd.f32 %v2008, %v2462
        %v2490 = vadd.f32 %v2009, %v2467
        %v2491 = vadd.f32 %v2010, %v2470
        %v2492 = vadd.f32 %v2011, %v2475
        %v2493 = vld [vmem:[%s6] sm:$0x1]
        %v2495 = vlaneseq
        %v2496 = vshrl.u32 %v2495, 7
        %v2497 = vsub.s32 0, %v2496
        %v2498 = vrot.slane %v2493, %v2497
        %v2500 = vadd.f32 %v2480, %v2498
        %v2501 = vadd.f32 %v2481, %v2498
        %v2502 = vadd.f32 %v2482, %v2498
        %v2503 = vadd.f32 %v2483, %v2498
        %v2504 = vadd.f32 %v2484, %v2498
        %v2505 = vadd.f32 %v2485, %v2498
        %v2506 = vadd.f32 %v2486, %v2498
        %v2507 = vadd.f32 %v2487, %v2498
        %v2508 = vadd.f32 %v2488, %v2498
        %v2509 = vadd.f32 %v2489, %v2498
        %v2510 = vadd.f32 %v2490, %v2498
        %v2511 = vadd.f32 %v2491, %v2498
        %v2512 = vadd.f32 %v2492, %v2498
        %2513 = vst [vmem:[%s295] sm:$0xff] %v2500
        %2514 = vst [vmem:[%s295 + $0x8] sm:$0xff] %v2501
        %2515 = vst [vmem:[%s295 + $0x10] sm:$0xff] %v2502
        %2516 = vst [vmem:[%s295 + $0x18] sm:$0xff] %v2503
        %2517 = vst [vmem:[%s295 + $0x20] sm:$0xff] %v2504
        %2518 = vst [vmem:[%s295 + $0x28] sm:$0xff] %v2505
        %2519 = vst [vmem:[%s295 + $0x30] sm:$0xff] %v2506
        %2520 = vst [vmem:[%s295 + $0x38] sm:$0xff] %v2507
        %2521 = vst [vmem:[%s295 + $0x40] sm:$0xff] %v2508
        %2522 = vst [vmem:[%s295 + $0x48] sm:$0xff] %v2509
        %2523 = vst [vmem:[%s295 + $0x50] sm:$0xff] %v2510
        %2524 = vst [vmem:[%s295 + $0x58] sm:$0xff] %v2511
        %2525 = vst [vmem:[%s295 + $0x60] sm:$0xff] %v2512
        %s2526 = smul.u32 13, %s19
        %p2527 = scmp.lt.s32.totalorder %s2526, 25
        %s2528 = scalar_select %p2527, %s2526, 25
        %s2529 = smul.addr %s2528, 8
        %s2530 = scalar_lea.vmem %s7, %s2529
        // Predicated region
        $region53: #{feed_forward_net.1} parent=47 // pred_check
          %p2531 = pneg %p189
        $region54: #{feed_forward_net.1} parent=47 // pred_check_branch
          %2533 = sbr.rel (%p2531) target = $region56
        $region55: #{feed_forward_net.1} parent=47 // pred_region
          %s2534 = smul.u32 13, %s19
        $region56: #{feed_forward_net.1} parent=47 // pred_fallthru
          _
      $region48: #{feed_forward_net.1} parent=5 // pred_fallthru
        _
      %p2535 = scmp.le.s32.totalorder 2, %s14
      // Predicated region
      $region57: #{feed_forward_net.1} parent=5 // pred_check
        %p2536 = pneg %p2535
      $region58: #{feed_forward_net.1} parent=5 // pred_check_branch
        %2538 = sbr.rel (%p2536) target = $region60
      $region59: #{feed_forward_net.1} parent=5 // pred_region
        %s2539 = ssub.s32 %s14, 2
        // Predicated region
        $region61: #{feed_forward_net.1} parent=59 // pred_check
          %p2540 = pneg %p195
        $region62: #{feed_forward_net.1} parent=59 // pred_check_branch
          %2542 = sbr.rel (%p2540) target = $region64
        $region63: #{feed_forward_net.1} parent=59 // pred_region
          %s2543 = smul.u32 13, %s20
          %p2544 = scmp.lt.s32.totalorder %s2543, 25
          %s2545 = scalar_select %p2544, %s2543, 25
          %s2546 = smul.addr %s2545, 8
          %s2547 = scalar_lea.vmem %s7, %s2546
        $region64: #{feed_forward_net.1} parent=59 // pred_fallthru
          _
      $region60: #{feed_forward_net.1} parent=5 // pred_fallthru
        _
    $region6: #{feed_forward_net.1} parent=1 // loop_footer
      %s18 = sadd.s32 1, %s14
    $region7: #{feed_forward_net.1} parent=1 // loop_footer_branch
      %13 = sbr.rel target = $region3
    $region8: #{feed_forward_net.1} parent=1 // loop_exit
      _
    %2548 = vsyncpa [#allocation3], 1
    %s2549 = scalar_lea.sflag [#allocation3], 1
    %2550 = vsyncpa %s2549, 1

</llo_original>
